<compile_context>
chip_gen: v7x
topology: tpu7x:2x2x1
jax: 0.10.0
libtpu: 0.0.40
codegen_flags: <defaults>
</compile_context>

<pallas_src>
import functools

import jax
import jax.numpy as jnp
from jax.experimental import pallas as pl
from jax.experimental.pallas import tpu as pltpu


# Layer widths of FMNIST_MLP: 784 -> 256 -> 128 -> 64 -> 32 -> 16 -> 10
DIMS = [28 * 28 * 1, 256, 128, 64, 32, 16, 10]
NON_NEGATIVE = [True, True, True, True, True, True]

LANE = 128
SUBLANE = 8


def _round_up(n, m):
    return ((n + m - 1) // m) * m


# Lane-padded per-layer dims: in [896,256,128,128,128,128], out [256,128,...]
PAD_IN = [_round_up(d, LANE) for d in DIMS[:-1]]
PAD_OUT = [_round_up(d, LANE) for d in DIMS[1:]]


def _default_tile_b():
    """128 rows fills v5e's 4x128x128 MXU; 256 for v6e/v7x's 2x256x256."""
    try:
        kind = jax.devices()[0].device_kind.lower()
        if "v5 lite" in kind or "v5e" in kind or "v5lite" in kind:
            return 128
    except Exception:
        pass
    return 256


def _mlp_kernel(n_layers, x_ref, *refs):
    """Fused 6-layer MLP on one batch tile: 5x(matmul+bias+ReLU)+matmul+bias.

    refs = (w1, b1, ..., w6, b6, o_ref).
    Weights arrive pre-clamped (non_negative), zero-padded to lane multiples
    and cast to bf16; biases are f32.  Each matmul runs bf16 x bf16 -> f32 on
    the MXU; bias add / ReLU stay in f32 on the VPU.
    """
    o_ref = refs[-1]
    param_refs = refs[:-1]

    h = x_ref[...]  # f32 (tile_b, 896)
    for layer in range(n_layers):
        w = param_refs[2 * layer][...]        # bf16 (in_pad, out_pad)
        b = param_refs[2 * layer + 1][...]    # f32  (1, out_pad)
        h = jnp.dot(h.astype(jnp.bfloat16), w,
                    preferred_element_type=jnp.float32) + b
        if layer < n_layers - 1:
            # RobustReLu with epsilon_a = 0 is a plain ReLU.
            h = jnp.maximum(h, 0.0)

    o_ref[...] = h.astype(o_ref.dtype)


def init_params(key, dims=DIMS, dtype=jnp.float32):
    """Deterministic parameter init (PyTorch-Linear-like uniform scale)."""
    params = []
    for i in range(len(dims) - 1):
        fan_in, fan_out = dims[i], dims[i + 1]
        key, kw, kb = jax.random.split(key, 3)
        bound = 1.0 / jnp.sqrt(jnp.asarray(fan_in, jnp.float32))
        # Stored as (in, out) so the kernel does h @ W.
        w = jax.random.uniform(kw, (fan_in, fan_out), dtype, -bound, bound)
        b = jax.random.uniform(kb, (1, fan_out), dtype, -bound, bound)
        params.append((w, b))
    return params


def fmnist_mlp_forward(x_nchw, params, non_negative=NON_NEGATIVE, tile_b=None):
    """Wrapper: flatten NCHW input, pad/clamp/cast params, run gridded kernel."""
    batch = x_nchw.shape[0]
    # Glue: same as torch x.view(x.shape[0], -1) — row-major flatten.
    x = x_nchw.reshape(batch, -1).astype(jnp.float32)
    n_layers = len(params)

    # ---- one-time param prep: non_negative clamp + zero-pad + bf16 cast ----
    flat_params = []
    for i, (w, b) in enumerate(params):
        w_eff = jnp.maximum(w, 0.0) if non_negative[i] else w
        wp = jnp.zeros((PAD_IN[i], PAD_OUT[i]), jnp.bfloat16)
        wp = wp.at[: w.shape[0], : w.shape[1]].set(w_eff.astype(jnp.bfloat16))
        bp = jnp.zeros((1, PAD_OUT[i]), jnp.float32)
        bp = bp.at[:, : b.shape[-1]].set(b.reshape(1, -1).astype(jnp.float32))
        flat_params.extend([wp, bp])

    # ---- batch tiling: pad batch to a multiple of the tile (>= 8 sublanes) --
    if tile_b is None:
        tile_b = _default_tile_b()
    tile_b = min(tile_b, _round_up(batch, SUBLANE))
    b_pad = _round_up(batch, tile_b)

    xp = jnp.zeros((b_pad, PAD_IN[0]), jnp.float32)
    xp = xp.at[:batch, : x.shape[1]].set(x)

    grid = (b_pad // tile_b,)
    out_pad = PAD_OUT[-1]

    def param_spec(p):
        # Whole array, VMEM-resident across grid steps (index_map ignores i).
        return pl.BlockSpec(p.shape, lambda i, nd=p.ndim: (0,) * nd)

    flops = 2 * b_pad * sum(PAD_IN[i] * PAD_OUT[i] for i in range(n_layers))
    bytes_accessed = (
        int(xp.size) * 4
        + b_pad * out_pad * 4
        + sum(int(p.size) * p.dtype.itemsize for p in flat_params)
    )

    out_padded = pl.pallas_call(
        functools.partial(_mlp_kernel, n_layers),
        out_shape=jax.ShapeDtypeStruct((b_pad, out_pad), jnp.float32),
        grid=grid,
        in_specs=[pl.BlockSpec((tile_b, PAD_IN[0]), lambda i: (i, 0))]
        + [param_spec(p) for p in flat_params],
        out_specs=pl.BlockSpec((tile_b, out_pad), lambda i: (i, 0)),
        compiler_params=pltpu.CompilerParams(
            dimension_semantics=("parallel",)),
        cost_estimate=pl.CostEstimate(
            flops=flops, transcendentals=0, bytes_accessed=bytes_accessed),
    )(xp, *flat_params)

    # Strip batch padding and lane padding of the 10 logits.
    return out_padded[:batch, : DIMS[-1]]


def _reference_forward(x_nchw, params, non_negative=NON_NEGATIVE):
    """Pure-JAX reference matching the kernel's bf16-matmul / f32-accumulate."""
    h = x_nchw.reshape(x_nchw.shape[0], -1).astype(jnp.float32)
    n = len(params)
    for i, (w, b) in enumerate(params):
        w_eff = jnp.maximum(w, 0.0) if non_negative[i] else w
        h = jnp.dot(h.astype(jnp.bfloat16), w_eff.astype(jnp.bfloat16),
                    preferred_element_type=jnp.float32) + b.reshape(1, -1)
        if i < n - 1:
            h = jnp.maximum(h, 0.0)
    return h


if __name__ == "__main__":
    key = jax.random.PRNGKey(0)
    key_x, key_p = jax.random.split(key)

    batch = 8
    x = jax.random.normal(key_x, (batch, 1, 28, 28), dtype=jnp.float32)
    params = init_params(key_p)

    out = fmnist_mlp_forward(x, params)
    out = jax.block_until_ready(out)

    ref = _reference_forward(x, params)
    assert out.shape == (batch, 10), out.shape
    assert jnp.allclose(out, ref, atol=1e-2, rtol=1e-2), (
        float(jnp.max(jnp.abs(out - ref)))
    )

    print("KERNEL_OK")
</pallas_src>

<mosaic_0001>
module attributes {stable_mosaic.version = 11 : i64} {
  func.func @_mlp_kernel(%arg0: i32, %arg1: memref<8x896xf32, #tpu.memory_space<vmem>>, %arg2: memref<896x256xbf16, #tpu.memory_space<vmem>>, %arg3: memref<1x256xf32, #tpu.memory_space<vmem>>, %arg4: memref<256x128xbf16, #tpu.memory_space<vmem>>, %arg5: memref<1x128xf32, #tpu.memory_space<vmem>>, %arg6: memref<128x128xbf16, #tpu.memory_space<vmem>>, %arg7: memref<1x128xf32, #tpu.memory_space<vmem>>, %arg8: memref<128x128xbf16, #tpu.memory_space<vmem>>, %arg9: memref<1x128xf32, #tpu.memory_space<vmem>>, %arg10: memref<128x128xbf16, #tpu.memory_space<vmem>>, %arg11: memref<1x128xf32, #tpu.memory_space<vmem>>, %arg12: memref<128x128xbf16, #tpu.memory_space<vmem>>, %arg13: memref<1x128xf32, #tpu.memory_space<vmem>>, %arg14: memref<8x128xf32, #tpu.memory_space<vmem>>) attributes {dimension_semantics = [#tpu.dimension_semantics<parallel>], iteration_bounds = array<i64: 1>, scalar_prefetch = 0 : i64, scratch_operands = 0 : i64, tpu.core_type = #tpu.core_type<tc>, window_params = [{transform_indices = @transform_0, window_bounds = array<i64: 8, 896>}, {pipeline_mode = #tpu.pipeline_mode<synchronous>, transform_indices = @transform_1, window_bounds = array<i64: 896, 256>}, {pipeline_mode = #tpu.pipeline_mode<synchronous>, transform_indices = @transform_2, window_bounds = array<i64: 1, 256>}, {pipeline_mode = #tpu.pipeline_mode<synchronous>, transform_indices = @transform_3, window_bounds = array<i64: 256, 128>}, {pipeline_mode = #tpu.pipeline_mode<synchronous>, transform_indices = @transform_4, window_bounds = array<i64: 1, 128>}, {pipeline_mode = #tpu.pipeline_mode<synchronous>, transform_indices = @transform_5, window_bounds = array<i64: 128, 128>}, {pipeline_mode = #tpu.pipeline_mode<synchronous>, transform_indices = @transform_6, window_bounds = array<i64: 1, 128>}, {pipeline_mode = #tpu.pipeline_mode<synchronous>, transform_indices = @transform_7, window_bounds = array<i64: 128, 128>}, {pipeline_mode = #tpu.pipeline_mode<synchronous>, transform_indices = @transform_8, window_bounds = array<i64: 1, 128>}, {pipeline_mode = #tpu.pipeline_mode<synchronous>, transform_indices = @transform_9, window_bounds = array<i64: 128, 128>}, {pipeline_mode = #tpu.pipeline_mode<synchronous>, transform_indices = @transform_10, window_bounds = array<i64: 1, 128>}, {pipeline_mode = #tpu.pipeline_mode<synchronous>, transform_indices = @transform_11, window_bounds = array<i64: 128, 128>}, {pipeline_mode = #tpu.pipeline_mode<synchronous>, transform_indices = @transform_12, window_bounds = array<i64: 1, 128>}, {transform_indices = @transform_13, window_bounds = array<i64: 8, 128>}]} {
    %c0 = arith.constant 0 : index
    %c0_0 = arith.constant 0 : index
    %0 = vector.load %arg1[%c0, %c0_0] : memref<8x896xf32, #tpu.memory_space<vmem>>, vector<8x896xf32>
    %c0_1 = arith.constant 0 : index
    %c0_2 = arith.constant 0 : index
    %1 = vector.load %arg2[%c0_1, %c0_2] : memref<896x256xbf16, #tpu.memory_space<vmem>>, vector<896x256xbf16>
    %c0_3 = arith.constant 0 : index
    %c0_4 = arith.constant 0 : index
    %2 = vector.load %arg3[%c0_3, %c0_4] : memref<1x256xf32, #tpu.memory_space<vmem>>, vector<1x256xf32>
    %3 = arith.truncf %0 : vector<8x896xf32> to vector<8x896xbf16>
    %cst = arith.constant dense<0.000000e+00> : vector<8x256xf32>
    %4 = tpu.matmul %3, %1, %cst {dimension_numbers = #tpu.dot_dimension_numbers<[1], [0], [0], [1], [0, 0, 1, 1], [], []>} : vector<8x896xbf16>, vector<896x256xbf16>, vector<8x256xf32> -> vector<8x256xf32>
    %5 = vector.broadcast %2 : vector<1x256xf32> to vector<8x256xf32>
    %6 = arith.addf %4, %5 : vector<8x256xf32>
    %cst_5 = arith.constant 0.000000e+00 : f32
    %7 = vector.broadcast %cst_5 : f32 to vector<8x256xf32>
    %8 = arith.maximumf %6, %7 : vector<8x256xf32>
    %c0_6 = arith.constant 0 : index
    %c0_7 = arith.constant 0 : index
    %9 = vector.load %arg4[%c0_6, %c0_7] : memref<256x128xbf16, #tpu.memory_space<vmem>>, vector<256x128xbf16>
    %c0_8 = arith.constant 0 : index
    %c0_9 = arith.constant 0 : index
    %10 = vector.load %arg5[%c0_8, %c0_9] : memref<1x128xf32, #tpu.memory_space<vmem>>, vector<1x128xf32>
    %11 = arith.truncf %8 : vector<8x256xf32> to vector<8x256xbf16>
    %cst_10 = arith.constant dense<0.000000e+00> : vector<8x128xf32>
    %12 = tpu.matmul %11, %9, %cst_10 {dimension_numbers = #tpu.dot_dimension_numbers<[1], [0], [0], [1], [0, 0, 1, 1], [], []>} : vector<8x256xbf16>, vector<256x128xbf16>, vector<8x128xf32> -> vector<8x128xf32>
    %13 = vector.broadcast %10 : vector<1x128xf32> to vector<8x128xf32>
    %14 = arith.addf %12, %13 : vector<8x128xf32>
    %cst_11 = arith.constant 0.000000e+00 : f32
    %15 = vector.broadcast %cst_11 : f32 to vector<8x128xf32>
    %16 = arith.maximumf %14, %15 : vector<8x128xf32>
    %c0_12 = arith.constant 0 : index
    %c0_13 = arith.constant 0 : index
    %17 = vector.load %arg6[%c0_12, %c0_13] : memref<128x128xbf16, #tpu.memory_space<vmem>>, vector<128x128xbf16>
    %c0_14 = arith.constant 0 : index
    %c0_15 = arith.constant 0 : index
    %18 = vector.load %arg7[%c0_14, %c0_15] : memref<1x128xf32, #tpu.memory_space<vmem>>, vector<1x128xf32>
    %19 = arith.truncf %16 : vector<8x128xf32> to vector<8x128xbf16>
    %cst_16 = arith.constant dense<0.000000e+00> : vector<8x128xf32>
    %20 = tpu.matmul %19, %17, %cst_16 {dimension_numbers = #tpu.dot_dimension_numbers<[1], [0], [0], [1], [0, 0, 1, 1], [], []>} : vector<8x128xbf16>, vector<128x128xbf16>, vector<8x128xf32> -> vector<8x128xf32>
    %21 = vector.broadcast %18 : vector<1x128xf32> to vector<8x128xf32>
    %22 = arith.addf %20, %21 : vector<8x128xf32>
    %cst_17 = arith.constant 0.000000e+00 : f32
    %23 = vector.broadcast %cst_17 : f32 to vector<8x128xf32>
    %24 = arith.maximumf %22, %23 : vector<8x128xf32>
    %c0_18 = arith.constant 0 : index
    %c0_19 = arith.constant 0 : index
    %25 = vector.load %arg8[%c0_18, %c0_19] : memref<128x128xbf16, #tpu.memory_space<vmem>>, vector<128x128xbf16>
    %c0_20 = arith.constant 0 : index
    %c0_21 = arith.constant 0 : index
    %26 = vector.load %arg9[%c0_20, %c0_21] : memref<1x128xf32, #tpu.memory_space<vmem>>, vector<1x128xf32>
    %27 = arith.truncf %24 : vector<8x128xf32> to vector<8x128xbf16>
    %cst_22 = arith.constant dense<0.000000e+00> : vector<8x128xf32>
    %28 = tpu.matmul %27, %25, %cst_22 {dimension_numbers = #tpu.dot_dimension_numbers<[1], [0], [0], [1], [0, 0, 1, 1], [], []>} : vector<8x128xbf16>, vector<128x128xbf16>, vector<8x128xf32> -> vector<8x128xf32>
    %29 = vector.broadcast %26 : vector<1x128xf32> to vector<8x128xf32>
    %30 = arith.addf %28, %29 : vector<8x128xf32>
    %cst_23 = arith.constant 0.000000e+00 : f32
    %31 = vector.broadcast %cst_23 : f32 to vector<8x128xf32>
    %32 = arith.maximumf %30, %31 : vector<8x128xf32>
    %c0_24 = arith.constant 0 : index
    %c0_25 = arith.constant 0 : index
    %33 = vector.load %arg10[%c0_24, %c0_25] : memref<128x128xbf16, #tpu.memory_space<vmem>>, vector<128x128xbf16>
    %c0_26 = arith.constant 0 : index
    %c0_27 = arith.constant 0 : index
    %34 = vector.load %arg11[%c0_26, %c0_27] : memref<1x128xf32, #tpu.memory_space<vmem>>, vector<1x128xf32>
    %35 = arith.truncf %32 : vector<8x128xf32> to vector<8x128xbf16>
    %cst_28 = arith.constant dense<0.000000e+00> : vector<8x128xf32>
    %36 = tpu.matmul %35, %33, %cst_28 {dimension_numbers = #tpu.dot_dimension_numbers<[1], [0], [0], [1], [0, 0, 1, 1], [], []>} : vector<8x128xbf16>, vector<128x128xbf16>, vector<8x128xf32> -> vector<8x128xf32>
    %37 = vector.broadcast %34 : vector<1x128xf32> to vector<8x128xf32>
    %38 = arith.addf %36, %37 : vector<8x128xf32>
    %cst_29 = arith.constant 0.000000e+00 : f32
    %39 = vector.broadcast %cst_29 : f32 to vector<8x128xf32>
    %40 = arith.maximumf %38, %39 : vector<8x128xf32>
    %c0_30 = arith.constant 0 : index
    %c0_31 = arith.constant 0 : index
    %41 = vector.load %arg12[%c0_30, %c0_31] : memref<128x128xbf16, #tpu.memory_space<vmem>>, vector<128x128xbf16>
    %c0_32 = arith.constant 0 : index
    %c0_33 = arith.constant 0 : index
    %42 = vector.load %arg13[%c0_32, %c0_33] : memref<1x128xf32, #tpu.memory_space<vmem>>, vector<1x128xf32>
    %43 = arith.truncf %40 : vector<8x128xf32> to vector<8x128xbf16>
    %cst_34 = arith.constant dense<0.000000e+00> : vector<8x128xf32>
    %44 = tpu.matmul %43, %41, %cst_34 {dimension_numbers = #tpu.dot_dimension_numbers<[1], [0], [0], [1], [0, 0, 1, 1], [], []>} : vector<8x128xbf16>, vector<128x128xbf16>, vector<8x128xf32> -> vector<8x128xf32>
    %45 = vector.broadcast %42 : vector<1x128xf32> to vector<8x128xf32>
    %46 = arith.addf %44, %45 : vector<8x128xf32>
    %c0_35 = arith.constant 0 : index
    %c0_36 = arith.constant 0 : index
    %47 = vector.load %arg14[%c0_35, %c0_36] : memref<8x128xf32, #tpu.memory_space<vmem>>, vector<8x128xf32>
    tpu.vector_store %arg14[%c0_35, %c0_36], %46 {strides = array<i32>} : memref<8x128xf32, #tpu.memory_space<vmem>>, vector<8x128xf32>,
    return
  }
  func.func @transform_0(%arg0: i32) -> (i32, i32) {
    %c0_i32 = arith.constant 0 : i32
    %c0_i32_0 = arith.constant 0 : i32
    return %arg0, %c0_i32 : i32, i32
  }
  func.func @transform_1(%arg0: i32) -> (i32, i32) {
    %c0_i32 = arith.constant 0 : i32
    %c0_i32_0 = arith.constant 0 : i32
    %c0_i32_1 = arith.constant 0 : i32
    return %c0_i32, %c0_i32_0 : i32, i32
  }
  func.func @transform_2(%arg0: i32) -> (i32, i32) {
    %c0_i32 = arith.constant 0 : i32
    %c0_i32_0 = arith.constant 0 : i32
    %c0_i32_1 = arith.constant 0 : i32
    return %c0_i32, %c0_i32_0 : i32, i32
  }
  func.func @transform_3(%arg0: i32) -> (i32, i32) {
    %c0_i32 = arith.constant 0 : i32
    %c0_i32_0 = arith.constant 0 : i32
    %c0_i32_1 = arith.constant 0 : i32
    return %c0_i32, %c0_i32_0 : i32, i32
  }
  func.func @transform_4(%arg0: i32) -> (i32, i32) {
    %c0_i32 = arith.constant 0 : i32
    %c0_i32_0 = arith.constant 0 : i32
    %c0_i32_1 = arith.constant 0 : i32
    return %c0_i32, %c0_i32_0 : i32, i32
  }
  func.func @transform_5(%arg0: i32) -> (i32, i32) {
    %c0_i32 = arith.constant 0 : i32
    %c0_i32_0 = arith.constant 0 : i32
    %c0_i32_1 = arith.constant 0 : i32
    return %c0_i32, %c0_i32_0 : i32, i32
  }
  func.func @transform_6(%arg0: i32) -> (i32, i32) {
    %c0_i32 = arith.constant 0 : i32
    %c0_i32_0 = arith.constant 0 : i32
    %c0_i32_1 = arith.constant 0 : i32
    return %c0_i32, %c0_i32_0 : i32, i32
  }
  func.func @transform_7(%arg0: i32) -> (i32, i32) {
    %c0_i32 = arith.constant 0 : i32
    %c0_i32_0 = arith.constant 0 : i32
    %c0_i32_1 = arith.constant 0 : i32
    return %c0_i32, %c0_i32_0 : i32, i32
  }
  func.func @transform_8(%arg0: i32) -> (i32, i32) {
    %c0_i32 = arith.constant 0 : i32
    %c0_i32_0 = arith.constant 0 : i32
    %c0_i32_1 = arith.constant 0 : i32
    return %c0_i32, %c0_i32_0 : i32, i32
  }
  func.func @transform_9(%arg0: i32) -> (i32, i32) {
    %c0_i32 = arith.constant 0 : i32
    %c0_i32_0 = arith.constant 0 : i32
    %c0_i32_1 = arith.constant 0 : i32
    return %c0_i32, %c0_i32_0 : i32, i32
  }
  func.func @transform_10(%arg0: i32) -> (i32, i32) {
    %c0_i32 = arith.constant 0 : i32
    %c0_i32_0 = arith.constant 0 : i32
    %c0_i32_1 = arith.constant 0 : i32
    return %c0_i32, %c0_i32_0 : i32, i32
  }
  func.func @transform_11(%arg0: i32) -> (i32, i32) {
    %c0_i32 = arith.constant 0 : i32
    %c0_i32_0 = arith.constant 0 : i32
    %c0_i32_1 = arith.constant 0 : i32
    return %c0_i32, %c0_i32_0 : i32, i32
  }
  func.func @transform_12(%arg0: i32) -> (i32, i32) {
    %c0_i32 = arith.constant 0 : i32
    %c0_i32_0 = arith.constant 0 : i32
    %c0_i32_1 = arith.constant 0 : i32
    return %c0_i32, %c0_i32_0 : i32, i32
  }
  func.func @transform_13(%arg0: i32) -> (i32, i32) {
    %c0_i32 = arith.constant 0 : i32
    %c0_i32_0 = arith.constant 0 : i32
    return %arg0, %c0_i32 : i32, i32
  }
}

</mosaic_0001>

<llo_original>
// kernel: tpu_custom_call.1
$region0: #{tpu_custom_call.1}
  #allocation0 [shape = 'u32[]', space=smem, size = 0x4, offset = 0x4, fixed_abs, tag = 'smem constant byte address 0x4 - core index']
  #allocation1 [shape = 'u32[144,128]{1,0:T(1,128)}', space=vmem, size = 0x12000, scoped, tag = 'internal scratch']
  %s0 = inlined_call_operand.hbm [shape: f32[8,896], index: 0, kind: input, shape index: {}]
  %s1 = inlined_call_operand.hbm [shape: bf16[896,256], index: 1, kind: input, shape index: {}]
  %s2 = inlined_call_operand.vmem [shape: f32[1,256], index: 2, kind: input, shape index: {}]
  %s3 = inlined_call_operand.hbm [shape: bf16[256,128], index: 3, kind: input, shape index: {}]
  %s4 = inlined_call_operand.vmem [shape: f32[1,128], index: 4, kind: input, shape index: {}]
  %s5 = inlined_call_operand.hbm [shape: bf16[128,128], index: 5, kind: input, shape index: {}]
  %s6 = inlined_call_operand.vmem [shape: f32[1,128], index: 6, kind: input, shape index: {}]
  %s7 = inlined_call_operand.hbm [shape: bf16[128,128], index: 7, kind: input, shape index: {}]
  %s8 = inlined_call_operand.vmem [shape: f32[1,128], index: 8, kind: input, shape index: {}]
  %s9 = inlined_call_operand.hbm [shape: bf16[128,128], index: 9, kind: input, shape index: {}]
  %s10 = inlined_call_operand.vmem [shape: f32[1,128], index: 10, kind: input, shape index: {}]
  %s11 = inlined_call_operand.hbm [shape: bf16[128,128], index: 11, kind: input, shape index: {}]
  %s12 = inlined_call_operand.vmem [shape: f32[1,128], index: 12, kind: input, shape index: {}]
  %s13 = inlined_call_operand.hbm [shape: f32[8,128], index: 13, kind: output, shape index: {}]
  %s14 = sld [smem:[#allocation0]]
  $region90: #{tpu_custom_call.1} parent=0
    _
  %s16 = ssub.s32 1, %s14
  %s17 = scalar_select 0, %s16, %s14
  $region1: #{tpu_custom_call.1} parent=0
    #allocation2 [shape = 'u8[28672]{0}', space=vmem, size = 0x7000, scoped, tag = 'input window, operand 0, single buffered']
    #allocation3 [shape = 's32[1]{0}', space=sflag, size = 0x4, scoped, tag = 'scoped memory for tpu_custom_call.1']
    #allocation4 [shape = 's32[1]{0}', space=sflag, size = 0x4, scoped, tag = 'scoped memory for tpu_custom_call.1']
    #allocation5 [shape = 'u8[458752]{0}', space=vmem, size = 0x70000, scoped, tag = 'input window, operand 1, single buffered']
    #allocation6 [shape = 's32[1]{0}', space=sflag, size = 0x4, scoped, tag = 'scoped memory for tpu_custom_call.1']
    #allocation7 [shape = 'u8[65536]{0}', space=vmem, size = 0x10000, scoped, tag = 'input window, operand 3, single buffered']
    #allocation8 [shape = 'u8[32768]{0}', space=vmem, size = 0x8000, scoped, tag = 'input window, operand 5, single buffered']
    #allocation9 [shape = 's32[1]{0}', space=sflag, size = 0x4, scoped, tag = 'scoped memory for tpu_custom_call.1']
    #allocation10 [shape = 'u8[32768]{0}', space=vmem, size = 0x8000, scoped, tag = 'input window, operand 7, single buffered']
    #allocation11 [shape = 'u8[32768]{0}', space=vmem, size = 0x8000, scoped, tag = 'input window, operand 9, single buffered']
    #allocation12 [shape = 's32[1]{0}', space=sflag, size = 0x4, scoped, tag = 'scoped memory for tpu_custom_call.1']
    #allocation13 [shape = 'u8[32768]{0}', space=vmem, size = 0x8000, scoped, tag = 'input window, operand 11, single buffered']
    #allocation14 [shape = 'u8[4096]{0}', space=vmem, size = 0x1000, scoped, tag = 'output window, operand 0, single buffered']
    %18 = vsyncpa [#allocation3], 0
    %19 = vsyncpa [#allocation6], 0
    %20 = vsyncpa [#allocation9], 0
    %21 = vsyncpa [#allocation12], 0
    %22 = vsyncpa [#allocation4], 0
    // Predicated region
    $region2: #{tpu_custom_call.1} parent=1 // pred_check
      _
    $region3: #{tpu_custom_call.1} parent=1 // pred_check_branch
      %24 = sbr.rel (0) target = $region5
    $region4: #{tpu_custom_call.1} parent=1 // pred_region
      %s26 = ssub.s32 896, 896
      %27 = vsyncadd [#allocation3], %s26
      %s29 = sshll.u32 [#allocation2], 4
      %s30 = int_to_ptr.vmem [resolvable:$true] %s29
      %32 = dma.hbm_to_vmem [thread:$0]  %s0, 896, %s30, [#allocation3]
    $region5: #{tpu_custom_call.1} parent=1 // pred_fallthru
      _
    // Predicated region
    $region6: #{tpu_custom_call.1} parent=1 // pred_check
      _
    $region7: #{tpu_custom_call.1} parent=1 // pred_check_branch
      %34 = sbr.rel (0) target = $region9
    $region8: #{tpu_custom_call.1} parent=1 // pred_region
      %s36 = ssub.s32 14336, 14336
      %37 = vsyncadd [#allocation6], %s36
      %s38 = sshll.u32 [#allocation5], 4
      %s39 = int_to_ptr.vmem [resolvable:$true] %s38
      %44 = dma.hbm_to_vmem [thread:$0]  %s1, 14336, %s39, [#allocation6], 128, 128, 8
    $region9: #{tpu_custom_call.1} parent=1 // pred_fallthru
      _
    // Predicated region
    $region10: #{tpu_custom_call.1} parent=1 // pred_check
      _
    $region11: #{tpu_custom_call.1} parent=1 // pred_check_branch
      %46 = sbr.rel (0) target = $region13
    $region12: #{tpu_custom_call.1} parent=1 // pred_region
      _
    $region13: #{tpu_custom_call.1} parent=1 // pred_fallthru
      _
    // Predicated region
    $region14: #{tpu_custom_call.1} parent=1 // pred_check
      _
    $region15: #{tpu_custom_call.1} parent=1 // pred_check_branch
      %48 = sbr.rel (0) target = $region17
    $region16: #{tpu_custom_call.1} parent=1 // pred_region
      %s50 = ssub.s32 2048, 2048
      %51 = vsyncadd [#allocation6], %s50
      %s52 = sshll.u32 [#allocation7], 4
      %s53 = int_to_ptr.vmem [resolvable:$true] %s52
      %58 = dma.hbm_to_vmem [thread:$0]  %s3, 2048, %s53, [#allocation6], 64, 64, 4
    $region17: #{tpu_custom_call.1} parent=1 // pred_fallthru
      _
    // Predicated region
    $region18: #{tpu_custom_call.1} parent=1 // pred_check
      _
    $region19: #{tpu_custom_call.1} parent=1 // pred_check_branch
      %60 = sbr.rel (0) target = $region21
    $region20: #{tpu_custom_call.1} parent=1 // pred_region
      _
    $region21: #{tpu_custom_call.1} parent=1 // pred_fallthru
      _
    // Predicated region
    $region22: #{tpu_custom_call.1} parent=1 // pred_check
      _
    $region23: #{tpu_custom_call.1} parent=1 // pred_check_branch
      %62 = sbr.rel (0) target = $region25
    $region24: #{tpu_custom_call.1} parent=1 // pred_region
      %s64 = ssub.s32 1024, 1024
      %65 = vsyncadd [#allocation9], %s64
      %s66 = sshll.u32 [#allocation8], 4
      %s67 = int_to_ptr.vmem [resolvable:$true] %s66
      %72 = dma.hbm_to_vmem [thread:$0]  %s5, 1024, %s67, [#allocation9], 64, 64, 4
    $region25: #{tpu_custom_call.1} parent=1 // pred_fallthru
      _
    // Predicated region
    $region26: #{tpu_custom_call.1} parent=1 // pred_check
      _
    $region27: #{tpu_custom_call.1} parent=1 // pred_check_branch
      %74 = sbr.rel (0) target = $region29
    $region28: #{tpu_custom_call.1} parent=1 // pred_region
      _
    $region29: #{tpu_custom_call.1} parent=1 // pred_fallthru
      _
    // Predicated region
    $region30: #{tpu_custom_call.1} parent=1 // pred_check
      _
    $region31: #{tpu_custom_call.1} parent=1 // pred_check_branch
      %76 = sbr.rel (0) target = $region33
    $region32: #{tpu_custom_call.1} parent=1 // pred_region
      %s78 = ssub.s32 1024, 1024
      %79 = vsyncadd [#allocation9], %s78
      %s80 = sshll.u32 [#allocation10], 4
      %s81 = int_to_ptr.vmem [resolvable:$true] %s80
      %86 = dma.hbm_to_vmem [thread:$0]  %s7, 1024, %s81, [#allocation9], 64, 64, 4
    $region33: #{tpu_custom_call.1} parent=1 // pred_fallthru
      _
    // Predicated region
    $region34: #{tpu_custom_call.1} parent=1 // pred_check
      _
    $region35: #{tpu_custom_call.1} parent=1 // pred_check_branch
      %88 = sbr.rel (0) target = $region37
    $region36: #{tpu_custom_call.1} parent=1 // pred_region
      _
    $region37: #{tpu_custom_call.1} parent=1 // pred_fallthru
      _
    // Predicated region
    $region38: #{tpu_custom_call.1} parent=1 // pred_check
      _
    $region39: #{tpu_custom_call.1} parent=1 // pred_check_branch
      %90 = sbr.rel (0) target = $region41
    $region40: #{tpu_custom_call.1} parent=1 // pred_region
      %s92 = ssub.s32 1024, 1024
      %93 = vsyncadd [#allocation12], %s92
      %s94 = sshll.u32 [#allocation11], 4
      %s95 = int_to_ptr.vmem [resolvable:$true] %s94
      %100 = dma.hbm_to_vmem [thread:$0]  %s9, 1024, %s95, [#allocation12], 64, 64, 4
    $region41: #{tpu_custom_call.1} parent=1 // pred_fallthru
      _
    // Predicated region
    $region42: #{tpu_custom_call.1} parent=1 // pred_check
      _
    $region43: #{tpu_custom_call.1} parent=1 // pred_check_branch
      %102 = sbr.rel (0) target = $region45
    $region44: #{tpu_custom_call.1} parent=1 // pred_region
      _
    $region45: #{tpu_custom_call.1} parent=1 // pred_fallthru
      _
    // Predicated region
    $region46: #{tpu_custom_call.1} parent=1 // pred_check
      _
    $region47: #{tpu_custom_call.1} parent=1 // pred_check_branch
      %104 = sbr.rel (0) target = $region49
    $region48: #{tpu_custom_call.1} parent=1 // pred_region
      %s106 = ssub.s32 1024, 1024
      %107 = vsyncadd [#allocation12], %s106
      %s108 = sshll.u32 [#allocation13], 4
      %s109 = int_to_ptr.vmem [resolvable:$true] %s108
      %114 = dma.hbm_to_vmem [thread:$0]  %s11, 1024, %s109, [#allocation12], 64, 64, 4
    $region49: #{tpu_custom_call.1} parent=1 // pred_fallthru
      _
    // Predicated region
    $region50: #{tpu_custom_call.1} parent=1 // pred_check
      _
    $region51: #{tpu_custom_call.1} parent=1 // pred_check_branch
      %116 = sbr.rel (0) target = $region53
    $region52: #{tpu_custom_call.1} parent=1 // pred_region
      _
    $region53: #{tpu_custom_call.1} parent=1 // pred_fallthru
      _
    // Predicated region
    $region54: #{tpu_custom_call.1} parent=1 // pred_check
      _
    $region55: #{tpu_custom_call.1} parent=1 // pred_check_branch
      %118 = sbr.rel (0) target = $region57
    $region56: #{tpu_custom_call.1} parent=1 // pred_region
      %119 = dma.done [#allocation3], 896
    $region57: #{tpu_custom_call.1} parent=1 // pred_fallthru
      _
    // Predicated region
    $region58: #{tpu_custom_call.1} parent=1 // pred_check
      _
    $region59: #{tpu_custom_call.1} parent=1 // pred_check_branch
      %121 = sbr.rel (0) target = $region61
    $region60: #{tpu_custom_call.1} parent=1 // pred_region
      %122 = dma.done [#allocation6], 14336
    $region61: #{tpu_custom_call.1} parent=1 // pred_fallthru
      _
    // Predicated region
    $region62: #{tpu_custom_call.1} parent=1 // pred_check
      _
    $region63: #{tpu_custom_call.1} parent=1 // pred_check_branch
      %124 = sbr.rel (0) target = $region65
    $region64: #{tpu_custom_call.1} parent=1 // pred_region
      %125 = dma.done [#allocation6], 2048
    $region65: #{tpu_custom_call.1} parent=1 // pred_fallthru
      _
    // Predicated region
    $region66: #{tpu_custom_call.1} parent=1 // pred_check
      _
    $region67: #{tpu_custom_call.1} parent=1 // pred_check_branch
      %127 = sbr.rel (0) target = $region69
    $region68: #{tpu_custom_call.1} parent=1 // pred_region
      %128 = dma.done [#allocation9], 1024
    $region69: #{tpu_custom_call.1} parent=1 // pred_fallthru
      _
    // Predicated region
    $region70: #{tpu_custom_call.1} parent=1 // pred_check
      _
    $region71: #{tpu_custom_call.1} parent=1 // pred_check_branch
      %130 = sbr.rel (0) target = $region73
    $region72: #{tpu_custom_call.1} parent=1 // pred_region
      %131 = dma.done [#allocation9], 1024
    $region73: #{tpu_custom_call.1} parent=1 // pred_fallthru
      _
    // Predicated region
    $region74: #{tpu_custom_call.1} parent=1 // pred_check
      _
    $region75: #{tpu_custom_call.1} parent=1 // pred_check_branch
      %133 = sbr.rel (0) target = $region77
    $region76: #{tpu_custom_call.1} parent=1 // pred_region
      %134 = dma.done [#allocation12], 1024
    $region77: #{tpu_custom_call.1} parent=1 // pred_fallthru
      _
    // Predicated region
    $region78: #{tpu_custom_call.1} parent=1 // pred_check
      _
    $region79: #{tpu_custom_call.1} parent=1 // pred_check_branch
      %136 = sbr.rel (0) target = $region81
    $region80: #{tpu_custom_call.1} parent=1 // pred_region
      %137 = dma.done [#allocation12], 1024
    $region81: #{tpu_custom_call.1} parent=1 // pred_fallthru
      _
    %v139 = vld [vmem:[#allocation2] sm:$0xff]
    %v140 = vld [vmem:[#allocation2 + $0x8] sm:$0xff]
    %v141 = vld [vmem:[#allocation2 + $0x10] sm:$0xff]
    %v142 = vld [vmem:[#allocation2 + $0x18] sm:$0xff]
    %v143 = vld [vmem:[#allocation2 + $0x20] sm:$0xff]
    %v144 = vld [vmem:[#allocation2 + $0x28] sm:$0xff]
    %v145 = vld [vmem:[#allocation2 + $0x30] sm:$0xff]
    %v146 = vld [vmem:[#allocation5] sm:$0xff]
    %v147 = vld [vmem:[#allocation5 + $0x8] sm:$0xff]
    %v148 = vld [vmem:[#allocation5 + $0x10] sm:$0xff]
    %v149 = vld [vmem:[#allocation5 + $0x18] sm:$0xff]
    %v150 = vld [vmem:[#allocation5 + $0x20] sm:$0xff]
    %v151 = vld [vmem:[#allocation5 + $0x28] sm:$0xff]
    %v152 = vld [vmem:[#allocation5 + $0x30] sm:$0xff]
    %v153 = vld [vmem:[#allocation5 + $0x38] sm:$0xff]
    %v154 = vld [vmem:[#allocation5 + $0x40] sm:$0xff]
    %v155 = vld [vmem:[#allocation5 + $0x48] sm:$0xff]
    %v156 = vld [vmem:[#allocation5 + $0x50] sm:$0xff]
    %v157 = vld [vmem:[#allocation5 + $0x58] sm:$0xff]
    %v158 = vld [vmem:[#allocation5 + $0x60] sm:$0xff]
    %v159 = vld [vmem:[#allocation5 + $0x68] sm:$0xff]
    %v160 = vld [vmem:[#allocation5 + $0x70] sm:$0xff]
    %v161 = vld [vmem:[#allocation5 + $0x78] sm:$0xff]
    %v162 = vld [vmem:[#allocation5 + $0x80] sm:$0xff]
    %v163 = vld [vmem:[#allocation5 + $0x88] sm:$0xff]
    %v164 = vld [vmem:[#allocation5 + $0x90] sm:$0xff]
    %v165 = vld [vmem:[#allocation5 + $0x98] sm:$0xff]
    %v166 = vld [vmem:[#allocation5 + $0xa0] sm:$0xff]
    %v167 = vld [vmem:[#allocation5 + $0xa8] sm:$0xff]
    %v168 = vld [vmem:[#allocation5 + $0xb0] sm:$0xff]
    %v169 = vld [vmem:[#allocation5 + $0xb8] sm:$0xff]
    %v170 = vld [vmem:[#allocation5 + $0xc0] sm:$0xff]
    %v171 = vld [vmem:[#allocation5 + $0xc8] sm:$0xff]
    %v172 = vld [vmem:[#allocation5 + $0xd0] sm:$0xff]
    %v173 = vld [vmem:[#allocation5 + $0xd8] sm:$0xff]
    %v174 = vld [vmem:[#allocation5 + $0xe0] sm:$0xff]
    %v175 = vld [vmem:[#allocation5 + $0xe8] sm:$0xff]
    %v176 = vld [vmem:[#allocation5 + $0xf0] sm:$0xff]
    %v177 = vld [vmem:[#allocation5 + $0xf8] sm:$0xff]
    %v178 = vld [vmem:[#allocation5 + $0x100] sm:$0xff]
    %v179 = vld [vmem:[#allocation5 + $0x108] sm:$0xff]
    %v180 = vld [vmem:[#allocation5 + $0x110] sm:$0xff]
    %v181 = vld [vmem:[#allocation5 + $0x118] sm:$0xff]
    %v182 = vld [vmem:[#allocation5 + $0x120] sm:$0xff]
    %v183 = vld [vmem:[#allocation5 + $0x128] sm:$0xff]
    %v184 = vld [vmem:[#allocation5 + $0x130] sm:$0xff]
    %v185 = vld [vmem:[#allocation5 + $0x138] sm:$0xff]
    %v186 = vld [vmem:[#allocation5 + $0x140] sm:$0xff]
    %v187 = vld [vmem:[#allocation5 + $0x148] sm:$0xff]
    %v188 = vld [vmem:[#allocation5 + $0x150] sm:$0xff]
    %v189 = vld [vmem:[#allocation5 + $0x158] sm:$0xff]
    %v190 = vld [vmem:[#allocation5 + $0x160] sm:$0xff]
    %v191 = vld [vmem:[#allocation5 + $0x168] sm:$0xff]
    %v192 = vld [vmem:[#allocation5 + $0x170] sm:$0xff]
    %v193 = vld [vmem:[#allocation5 + $0x178] sm:$0xff]
    %v194 = vld [vmem:[#allocation5 + $0x180] sm:$0xff]
    %v195 = vld [vmem:[#allocation5 + $0x188] sm:$0xff]
    %v196 = vld [vmem:[#allocation5 + $0x190] sm:$0xff]
    %v197 = vld [vmem:[#allocation5 + $0x198] sm:$0xff]
    %v198 = vld [vmem:[#allocation5 + $0x1a0] sm:$0xff]
    %v199 = vld [vmem:[#allocation5 + $0x1a8] sm:$0xff]
    %v200 = vld [vmem:[#allocation5 + $0x1b0] sm:$0xff]
    %v201 = vld [vmem:[#allocation5 + $0x1b8] sm:$0xff]
    %v202 = vld [vmem:[#allocation5 + $0x1c0] sm:$0xff]
    %v203 = vld [vmem:[#allocation5 + $0x1c8] sm:$0xff]
    %v204 = vld [vmem:[#allocation5 + $0x1d0] sm:$0xff]
    %v205 = vld [vmem:[#allocation5 + $0x1d8] sm:$0xff]
    %v206 = vld [vmem:[#allocation5 + $0x1e0] sm:$0xff]
    %v207 = vld [vmem:[#allocation5 + $0x1e8] sm:$0xff]
    %v208 = vld [vmem:[#allocation5 + $0x1f0] sm:$0xff]
    %v209 = vld [vmem:[#allocation5 + $0x1f8] sm:$0xff]
    %v210 = vld [vmem:[#allocation5 + $0x200] sm:$0xff]
    %v211 = vld [vmem:[#allocation5 + $0x208] sm:$0xff]
    %v212 = vld [vmem:[#allocation5 + $0x210] sm:$0xff]
    %v213 = vld [vmem:[#allocation5 + $0x218] sm:$0xff]
    %v214 = vld [vmem:[#allocation5 + $0x220] sm:$0xff]
    %v215 = vld [vmem:[#allocation5 + $0x228] sm:$0xff]
    %v216 = vld [vmem:[#allocation5 + $0x230] sm:$0xff]
    %v217 = vld [vmem:[#allocation5 + $0x238] sm:$0xff]
    %v218 = vld [vmem:[#allocation5 + $0x240] sm:$0xff]
    %v219 = vld [vmem:[#allocation5 + $0x248] sm:$0xff]
    %v220 = vld [vmem:[#allocation5 + $0x250] sm:$0xff]
    %v221 = vld [vmem:[#allocation5 + $0x258] sm:$0xff]
    %v222 = vld [vmem:[#allocation5 + $0x260] sm:$0xff]
    %v223 = vld [vmem:[#allocation5 + $0x268] sm:$0xff]
    %v224 = vld [vmem:[#allocation5 + $0x270] sm:$0xff]
    %v225 = vld [vmem:[#allocation5 + $0x278] sm:$0xff]
    %v226 = vld [vmem:[#allocation5 + $0x280] sm:$0xff]
    %v227 = vld [vmem:[#allocation5 + $0x288] sm:$0xff]
    %v228 = vld [vmem:[#allocation5 + $0x290] sm:$0xff]
    %v229 = vld [vmem:[#allocation5 + $0x298] sm:$0xff]
    %v230 = vld [vmem:[#allocation5 + $0x2a0] sm:$0xff]
    %v231 = vld [vmem:[#allocation5 + $0x2a8] sm:$0xff]
    %v232 = vld [vmem:[#allocation5 + $0x2b0] sm:$0xff]
    %v233 = vld [vmem:[#allocation5 + $0x2b8] sm:$0xff]
    %v234 = vld [vmem:[#allocation5 + $0x2c0] sm:$0xff]
    %v235 = vld [vmem:[#allocation5 + $0x2c8] sm:$0xff]
    %v236 = vld [vmem:[#allocation5 + $0x2d0] sm:$0xff]
    %v237 = vld [vmem:[#allocation5 + $0x2d8] sm:$0xff]
    %v238 = vld [vmem:[#allocation5 + $0x2e0] sm:$0xff]
    %v239 = vld [vmem:[#allocation5 + $0x2e8] sm:$0xff]
    %v240 = vld [vmem:[#allocation5 + $0x2f0] sm:$0xff]
    %v241 = vld [vmem:[#allocation5 + $0x2f8] sm:$0xff]
    %v242 = vld [vmem:[#allocation5 + $0x300] sm:$0xff]
    %v243 = vld [vmem:[#allocation5 + $0x308] sm:$0xff]
    %v244 = vld [vmem:[#allocation5 + $0x310] sm:$0xff]
    %v245 = vld [vmem:[#allocation5 + $0x318] sm:$0xff]
    %v246 = vld [vmem:[#allocation5 + $0x320] sm:$0xff]
    %v247 = vld [vmem:[#allocation5 + $0x328] sm:$0xff]
    %v248 = vld [vmem:[#allocation5 + $0x330] sm:$0xff]
    %v249 = vld [vmem:[#allocation5 + $0x338] sm:$0xff]
    %v250 = vld [vmem:[#allocation5 + $0x340] sm:$0xff]
    %v251 = vld [vmem:[#allocation5 + $0x348] sm:$0xff]
    %v252 = vld [vmem:[#allocation5 + $0x350] sm:$0xff]
    %v253 = vld [vmem:[#allocation5 + $0x358] sm:$0xff]
    %v254 = vld [vmem:[#allocation5 + $0x360] sm:$0xff]
    %v255 = vld [vmem:[#allocation5 + $0x368] sm:$0xff]
    %v256 = vld [vmem:[#allocation5 + $0x370] sm:$0xff]
    %v257 = vld [vmem:[#allocation5 + $0x378] sm:$0xff]
    %v258 = vld [vmem:[%s2] sm:$0x3]
    %v259 = vpack.c.bf16 %v139, %v139
    %v260 = vpack.c.bf16 %v140, %v140
    %v261 = vpack.c.bf16 %v141, %v141
    %v262 = vpack.c.bf16 %v142, %v142
    %v263 = vpack.c.bf16 %v143, %v143
    %v264 = vpack.c.bf16 %v144, %v144
    %v265 = vpack.c.bf16 %v145, %v145
    %v267 = vlaneseq
    %v268 = vshrl.u32 %v267, 7
    %v269 = vsub.s32 0, %v268
    %v270 = vrot.slane %v258, %v269
    %v271 = vlaneseq
    %v272 = vshrl.u32 %v271, 7
    %v273 = vsub.s32 1, %v272
    %v274 = vrot.slane %v258, %v273
    %v389 = vunpack.c.l.b16 %v146
    %v390 = vunpack.c.h.b16 %v146
    %v391 = vunpack.c.l.b16 %v147
    %v392 = vunpack.c.h.b16 %v147
    %v393 = vunpack.c.l.b16 %v148
    %v394 = vunpack.c.h.b16 %v148
    %v395 = vunpack.c.l.b16 %v149
    %v396 = vunpack.c.h.b16 %v149
    %v397 = vunpack.c.l.b16 %v150
    %v398 = vunpack.c.h.b16 %v150
    %v399 = vunpack.c.l.b16 %v151
    %v400 = vunpack.c.h.b16 %v151
    %v401 = vunpack.c.l.b16 %v152
    %v402 = vunpack.c.h.b16 %v152
    %v403 = vunpack.c.l.b16 %v153
    %v404 = vunpack.c.h.b16 %v153
    %v405 = vunpack.c.l.b16 %v154
    %v406 = vunpack.c.h.b16 %v154
    %v407 = vunpack.c.l.b16 %v155
    %v408 = vunpack.c.h.b16 %v155
    %v409 = vunpack.c.l.b16 %v156
    %v410 = vunpack.c.h.b16 %v156
    %v411 = vunpack.c.l.b16 %v157
    %v412 = vunpack.c.h.b16 %v157
    %v413 = vunpack.c.l.b16 %v158
    %v414 = vunpack.c.h.b16 %v158
    %v415 = vunpack.c.l.b16 %v159
    %v416 = vunpack.c.h.b16 %v159
    %v417 = vunpack.c.l.b16 %v160
    %v418 = vunpack.c.h.b16 %v160
    %v419 = vunpack.c.l.b16 %v161
    %v420 = vunpack.c.h.b16 %v161
    %v421 = vunpack.c.l.b16 %v162
    %v422 = vunpack.c.h.b16 %v162
    %v423 = vunpack.c.l.b16 %v163
    %v424 = vunpack.c.h.b16 %v163
    %v425 = vunpack.c.l.b16 %v164
    %v426 = vunpack.c.h.b16 %v164
    %v427 = vunpack.c.l.b16 %v165
    %v428 = vunpack.c.h.b16 %v165
    %v429 = vunpack.c.l.b16 %v166
    %v430 = vunpack.c.h.b16 %v166
    %v431 = vunpack.c.l.b16 %v167
    %v432 = vunpack.c.h.b16 %v167
    %v433 = vunpack.c.l.b16 %v168
    %v434 = vunpack.c.h.b16 %v168
    %v435 = vunpack.c.l.b16 %v169
    %v436 = vunpack.c.h.b16 %v169
    %v437 = vunpack.c.l.b16 %v170
    %v438 = vunpack.c.h.b16 %v170
    %v439 = vunpack.c.l.b16 %v171
    %v440 = vunpack.c.h.b16 %v171
    %v441 = vunpack.c.l.b16 %v172
    %v442 = vunpack.c.h.b16 %v172
    %v443 = vunpack.c.l.b16 %v173
    %v444 = vunpack.c.h.b16 %v173
    %v445 = vunpack.c.l.b16 %v174
    %v446 = vunpack.c.h.b16 %v174
    %v447 = vunpack.c.l.b16 %v175
    %v448 = vunpack.c.h.b16 %v175
    %v449 = vunpack.c.l.b16 %v176
    %v450 = vunpack.c.h.b16 %v176
    %v451 = vunpack.c.l.b16 %v177
    %v452 = vunpack.c.h.b16 %v177
    %v453 = vunpack.c.l.b16 %v178
    %v454 = vunpack.c.h.b16 %v178
    %v455 = vunpack.c.l.b16 %v179
    %v456 = vunpack.c.h.b16 %v179
    %v457 = vunpack.c.l.b16 %v180
    %v458 = vunpack.c.h.b16 %v180
    %v459 = vunpack.c.l.b16 %v181
    %v460 = vunpack.c.h.b16 %v181
    %v461 = vunpack.c.l.b16 %v182
    %v462 = vunpack.c.h.b16 %v182
    %v463 = vunpack.c.l.b16 %v183
    %v464 = vunpack.c.h.b16 %v183
    %v465 = vunpack.c.l.b16 %v184
    %v466 = vunpack.c.h.b16 %v184
    %v467 = vunpack.c.l.b16 %v185
    %v468 = vunpack.c.h.b16 %v185
    %v469 = vunpack.c.l.b16 %v186
    %v470 = vunpack.c.h.b16 %v186
    %v471 = vunpack.c.l.b16 %v187
    %v472 = vunpack.c.h.b16 %v187
    %v473 = vunpack.c.l.b16 %v188
    %v474 = vunpack.c.h.b16 %v188
    %v475 = vunpack.c.l.b16 %v189
    %v476 = vunpack.c.h.b16 %v189
    %v477 = vunpack.c.l.b16 %v190
    %v478 = vunpack.c.h.b16 %v190
    %v479 = vunpack.c.l.b16 %v191
    %v480 = vunpack.c.h.b16 %v191
    %v481 = vunpack.c.l.b16 %v192
    %v482 = vunpack.c.h.b16 %v192
    %v483 = vunpack.c.l.b16 %v193
    %v484 = vunpack.c.h.b16 %v193
    %v485 = vunpack.c.l.b16 %v194
    %v486 = vunpack.c.h.b16 %v194
    %v487 = vunpack.c.l.b16 %v195
    %v488 = vunpack.c.h.b16 %v195
    %v489 = vunpack.c.l.b16 %v196
    %v490 = vunpack.c.h.b16 %v196
    %v491 = vunpack.c.l.b16 %v197
    %v492 = vunpack.c.h.b16 %v197
    %v493 = vunpack.c.l.b16 %v198
    %v494 = vunpack.c.h.b16 %v198
    %v495 = vunpack.c.l.b16 %v199
    %v496 = vunpack.c.h.b16 %v199
    %v497 = vunpack.c.l.b16 %v200
    %v498 = vunpack.c.h.b16 %v200
    %v499 = vunpack.c.l.b16 %v201
    %v500 = vunpack.c.h.b16 %v201
    %v501 = vunpack.c.l.b16 %v202
    %v502 = vunpack.c.h.b16 %v202
    %v503 = vunpack.c.l.b16 %v203
    %v504 = vunpack.c.h.b16 %v203
    %v505 = vunpack.c.l.b16 %v204
    %v506 = vunpack.c.h.b16 %v204
    %v507 = vunpack.c.l.b16 %v205
    %v508 = vunpack.c.h.b16 %v205
    %v509 = vunpack.c.l.b16 %v206
    %v510 = vunpack.c.h.b16 %v206
    %v511 = vunpack.c.l.b16 %v207
    %v512 = vunpack.c.h.b16 %v207
    %v513 = vunpack.c.l.b16 %v208
    %v514 = vunpack.c.h.b16 %v208
    %v515 = vunpack.c.l.b16 %v209
    %v516 = vunpack.c.h.b16 %v209
    %v517 = vunpack.c.l.b16 %v210
    %v518 = vunpack.c.h.b16 %v210
    %v519 = vunpack.c.l.b16 %v211
    %v520 = vunpack.c.h.b16 %v211
    %v521 = vunpack.c.l.b16 %v212
    %v522 = vunpack.c.h.b16 %v212
    %v523 = vunpack.c.l.b16 %v213
    %v524 = vunpack.c.h.b16 %v213
    %v525 = vunpack.c.l.b16 %v214
    %v526 = vunpack.c.h.b16 %v214
    %v527 = vunpack.c.l.b16 %v215
    %v528 = vunpack.c.h.b16 %v215
    %v529 = vunpack.c.l.b16 %v216
    %v530 = vunpack.c.h.b16 %v216
    %v531 = vunpack.c.l.b16 %v217
    %v532 = vunpack.c.h.b16 %v217
    %v533 = vunpack.c.l.b16 %v218
    %v534 = vunpack.c.h.b16 %v218
    %v535 = vunpack.c.l.b16 %v219
    %v536 = vunpack.c.h.b16 %v219
    %v537 = vunpack.c.l.b16 %v220
    %v538 = vunpack.c.h.b16 %v220
    %v539 = vunpack.c.l.b16 %v221
    %v540 = vunpack.c.h.b16 %v221
    %v541 = vunpack.c.l.b16 %v222
    %v542 = vunpack.c.h.b16 %v222
    %v543 = vunpack.c.l.b16 %v223
    %v544 = vunpack.c.h.b16 %v223
    %v545 = vunpack.c.l.b16 %v224
    %v546 = vunpack.c.h.b16 %v224
    %v547 = vunpack.c.l.b16 %v225
    %v548 = vunpack.c.h.b16 %v225
    %v549 = vunpack.c.l.b16 %v226
    %v550 = vunpack.c.h.b16 %v226
    %v551 = vunpack.c.l.b16 %v227
    %v552 = vunpack.c.h.b16 %v227
    %v553 = vunpack.c.l.b16 %v228
    %v554 = vunpack.c.h.b16 %v228
    %v555 = vunpack.c.l.b16 %v229
    %v556 = vunpack.c.h.b16 %v229
    %v557 = vunpack.c.l.b16 %v230
    %v558 = vunpack.c.h.b16 %v230
    %v559 = vunpack.c.l.b16 %v231
    %v560 = vunpack.c.h.b16 %v231
    %v561 = vunpack.c.l.b16 %v232
    %v562 = vunpack.c.h.b16 %v232
    %v563 = vunpack.c.l.b16 %v233
    %v564 = vunpack.c.h.b16 %v233
    %v565 = vunpack.c.l.b16 %v234
    %v566 = vunpack.c.h.b16 %v234
    %v567 = vunpack.c.l.b16 %v235
    %v568 = vunpack.c.h.b16 %v235
    %v569 = vunpack.c.l.b16 %v236
    %v570 = vunpack.c.h.b16 %v236
    %v571 = vunpack.c.l.b16 %v237
    %v572 = vunpack.c.h.b16 %v237
    %v573 = vunpack.c.l.b16 %v238
    %v574 = vunpack.c.h.b16 %v238
    %v575 = vunpack.c.l.b16 %v239
    %v576 = vunpack.c.h.b16 %v239
    %v577 = vunpack.c.l.b16 %v240
    %v578 = vunpack.c.h.b16 %v240
    %v579 = vunpack.c.l.b16 %v241
    %v580 = vunpack.c.h.b16 %v241
    %v581 = vunpack.c.l.b16 %v242
    %v582 = vunpack.c.h.b16 %v242
    %v583 = vunpack.c.l.b16 %v243
    %v584 = vunpack.c.h.b16 %v243
    %v585 = vunpack.c.l.b16 %v244
    %v586 = vunpack.c.h.b16 %v244
    %v587 = vunpack.c.l.b16 %v245
    %v588 = vunpack.c.h.b16 %v245
    %v589 = vunpack.c.l.b16 %v246
    %v590 = vunpack.c.h.b16 %v246
    %v591 = vunpack.c.l.b16 %v247
    %v592 = vunpack.c.h.b16 %v247
    %v593 = vunpack.c.l.b16 %v248
    %v594 = vunpack.c.h.b16 %v248
    %v595 = vunpack.c.l.b16 %v249
    %v596 = vunpack.c.h.b16 %v249
    %v597 = vunpack.c.l.b16 %v250
    %v598 = vunpack.c.h.b16 %v250
    %v599 = vunpack.c.l.b16 %v251
    %v600 = vunpack.c.h.b16 %v251
    %v601 = vunpack.c.l.b16 %v252
    %v602 = vunpack.c.h.b16 %v252
    %v603 = vunpack.c.l.b16 %v253
    %v604 = vunpack.c.h.b16 %v253
    %v605 = vunpack.c.l.b16 %v254
    %v606 = vunpack.c.h.b16 %v254
    %v607 = vunpack.c.l.b16 %v255
    %v608 = vunpack.c.h.b16 %v255
    %v609 = vunpack.c.l.b16 %v256
    %v610 = vunpack.c.h.b16 %v256
    %v611 = vunpack.c.l.b16 %v257
    %v612 = vunpack.c.h.b16 %v257
    %v613 = vpack.c.b16 %v391, %v389
    %v614 = vpack.c.b16 %v392, %v390
    %v615 = vpack.c.b16 %v395, %v393
    %v616 = vpack.c.b16 %v396, %v394
    %v617 = vpack.c.b16 %v399, %v397
    %v618 = vpack.c.b16 %v400, %v398
    %v619 = vpack.c.b16 %v403, %v401
    %v620 = vpack.c.b16 %v404, %v402
    %v621 = vpack.c.b16 %v407, %v405
    %v622 = vpack.c.b16 %v408, %v406
    %v623 = vpack.c.b16 %v411, %v409
    %v624 = vpack.c.b16 %v412, %v410
    %v625 = vpack.c.b16 %v415, %v413
    %v626 = vpack.c.b16 %v416, %v414
    %v627 = vpack.c.b16 %v419, %v417
    %v628 = vpack.c.b16 %v420, %v418
    %v629 = vpack.c.b16 %v423, %v421
    %v630 = vpack.c.b16 %v424, %v422
    %v631 = vpack.c.b16 %v427, %v425
    %v632 = vpack.c.b16 %v428, %v426
    %v633 = vpack.c.b16 %v431, %v429
    %v634 = vpack.c.b16 %v432, %v430
    %v635 = vpack.c.b16 %v435, %v433
    %v636 = vpack.c.b16 %v436, %v434
    %v637 = vpack.c.b16 %v439, %v437
    %v638 = vpack.c.b16 %v440, %v438
    %v639 = vpack.c.b16 %v443, %v441
    %v640 = vpack.c.b16 %v444, %v442
    %v641 = vpack.c.b16 %v447, %v445
    %v642 = vpack.c.b16 %v448, %v446
    %v643 = vpack.c.b16 %v451, %v449
    %v644 = vpack.c.b16 %v452, %v450
    %v645 = vpack.c.b16 %v455, %v453
    %v646 = vpack.c.b16 %v456, %v454
    %v647 = vpack.c.b16 %v459, %v457
    %v648 = vpack.c.b16 %v460, %v458
    %v649 = vpack.c.b16 %v463, %v461
    %v650 = vpack.c.b16 %v464, %v462
    %v651 = vpack.c.b16 %v467, %v465
    %v652 = vpack.c.b16 %v468, %v466
    %v653 = vpack.c.b16 %v471, %v469
    %v654 = vpack.c.b16 %v472, %v470
    %v655 = vpack.c.b16 %v475, %v473
    %v656 = vpack.c.b16 %v476, %v474
    %v657 = vpack.c.b16 %v479, %v477
    %v658 = vpack.c.b16 %v480, %v478
    %v659 = vpack.c.b16 %v483, %v481
    %v660 = vpack.c.b16 %v484, %v482
    %v661 = vpack.c.b16 %v487, %v485
    %v662 = vpack.c.b16 %v488, %v486
    %v663 = vpack.c.b16 %v491, %v489
    %v664 = vpack.c.b16 %v492, %v490
    %v665 = vpack.c.b16 %v495, %v493
    %v666 = vpack.c.b16 %v496, %v494
    %v667 = vpack.c.b16 %v499, %v497
    %v668 = vpack.c.b16 %v500, %v498
    %v669 = vpack.c.b16 %v503, %v501
    %v670 = vpack.c.b16 %v504, %v502
    %v671 = vpack.c.b16 %v507, %v505
    %v672 = vpack.c.b16 %v508, %v506
    %v673 = vpack.c.b16 %v511, %v509
    %v674 = vpack.c.b16 %v512, %v510
    %v675 = vpack.c.b16 %v515, %v513
    %v676 = vpack.c.b16 %v516, %v514
    %v677 = vpack.c.b16 %v519, %v517
    %v678 = vpack.c.b16 %v520, %v518
    %v679 = vpack.c.b16 %v523, %v521
    %v680 = vpack.c.b16 %v524, %v522
    %v681 = vpack.c.b16 %v527, %v525
    %v682 = vpack.c.b16 %v528, %v526
    %v683 = vpack.c.b16 %v531, %v529
    %v684 = vpack.c.b16 %v532, %v530
    %v685 = vpack.c.b16 %v535, %v533
    %v686 = vpack.c.b16 %v536, %v534
    %v687 = vpack.c.b16 %v539, %v537
    %v688 = vpack.c.b16 %v540, %v538
    %v689 = vpack.c.b16 %v543, %v541
    %v690 = vpack.c.b16 %v544, %v542
    %v691 = vpack.c.b16 %v547, %v545
    %v692 = vpack.c.b16 %v548, %v546
    %v693 = vpack.c.b16 %v551, %v549
    %v694 = vpack.c.b16 %v552, %v550
    %v695 = vpack.c.b16 %v555, %v553
    %v696 = vpack.c.b16 %v556, %v554
    %v697 = vpack.c.b16 %v559, %v557
    %v698 = vpack.c.b16 %v560, %v558
    %v699 = vpack.c.b16 %v563, %v561
    %v700 = vpack.c.b16 %v564, %v562
    %v701 = vpack.c.b16 %v567, %v565
    %v702 = vpack.c.b16 %v568, %v566
    %v703 = vpack.c.b16 %v571, %v569
    %v704 = vpack.c.b16 %v572, %v570
    %v705 = vpack.c.b16 %v575, %v573
    %v706 = vpack.c.b16 %v576, %v574
    %v707 = vpack.c.b16 %v579, %v577
    %v708 = vpack.c.b16 %v580, %v578
    %v709 = vpack.c.b16 %v583, %v581
    %v710 = vpack.c.b16 %v584, %v582
    %v711 = vpack.c.b16 %v587, %v585
    %v712 = vpack.c.b16 %v588, %v586
    %v713 = vpack.c.b16 %v591, %v589
    %v714 = vpack.c.b16 %v592, %v590
    %v715 = vpack.c.b16 %v595, %v593
    %v716 = vpack.c.b16 %v596, %v594
    %v717 = vpack.c.b16 %v599, %v597
    %v718 = vpack.c.b16 %v600, %v598
    %v719 = vpack.c.b16 %v603, %v601
    %v720 = vpack.c.b16 %v604, %v602
    %v721 = vpack.c.b16 %v607, %v605
    %v722 = vpack.c.b16 %v608, %v606
    %v723 = vpack.c.b16 %v611, %v609
    %v724 = vpack.c.b16 %v612, %v610
    %837 = vmatprep.subr.bf16.mxu0 %v614
    %838 = vmatpush1.bf16.msra.mxu0 %v613
    %839 = vmatprep.subr.bf16.mxu0 %v616
    %840 = vmatpush1.bf16.msra.mxu0 %v615
    %841 = vmatprep.subr.bf16.mxu0 %v618
    %842 = vmatpush1.bf16.msra.mxu0 %v617
    %843 = vmatprep.subr.bf16.mxu0 %v620
    %844 = vmatpush1.bf16.msra.mxu0 %v619
    %845 = vmatprep.subr.bf16.mxu0 %v622
    %846 = vmatpush1.bf16.msra.mxu0 %v621
    %847 = vmatprep.subr.bf16.mxu0 %v624
    %848 = vmatpush1.bf16.msra.mxu0 %v623
    %849 = vmatprep.subr.bf16.mxu0 %v626
    %850 = vmatpush1.bf16.msra.mxu0 %v625
    %851 = vmatprep.subr.bf16.mxu0 %v628
    %852 = vmatpush1.bf16.msra.mxu0 %v627
    %853 = vmatprep.subr.bf16.mxu0 %v630
    %854 = vmatpush1.bf16.msra.mxu0 %v629
    %855 = vmatprep.subr.bf16.mxu0 %v632
    %856 = vmatpush1.bf16.msra.mxu0 %v631
    %857 = vmatprep.subr.bf16.mxu0 %v634
    %858 = vmatpush1.bf16.msra.mxu0 %v633
    %859 = vmatprep.subr.bf16.mxu0 %v636
    %860 = vmatpush1.bf16.msra.mxu0 %v635
    %861 = vmatprep.subr.bf16.mxu0 %v638
    %862 = vmatpush1.bf16.msra.mxu0 %v637
    %863 = vmatprep.subr.bf16.mxu0 %v640
    %864 = vmatpush1.bf16.msra.mxu0 %v639
    %865 = vmatprep.subr.bf16.mxu0 %v642
    %866 = vmatpush1.bf16.msra.mxu0 %v641
    %867 = vmatprep.subr.bf16.mxu0 %v644
    %868 = vmatpush1.bf16.msra.mxu0 %v643
    %869 = vmatprep.mubr.bf16.mxu0 %v260
    %870 = vmatmul.mubr.bf16.gmra.mrb[0].mxu0 %v259
    %v871 = vpop.f32.mrb[0].mxu0
    %v872 = vadd.f32 %v270, %v871
    %v873 = vpop.f32.mrb[0].mxu0
    %v874 = vadd.f32 %v274, %v873
    %v875 = vpop.f32.mrb[0].mxu0
    %v876 = vpop.f32.mrb[0].mxu0
    %877 = vdwg.mxu0
    %878 = vmatprep.subr.bf16.mxu0 %v646
    %879 = vmatpush1.bf16.msra.mxu0 %v645
    %880 = vmatprep.subr.bf16.mxu0 %v648
    %881 = vmatpush1.bf16.msra.mxu0 %v647
    %882 = vmatprep.subr.bf16.mxu0 %v650
    %883 = vmatpush1.bf16.msra.mxu0 %v649
    %884 = vmatprep.subr.bf16.mxu0 %v652
    %885 = vmatpush1.bf16.msra.mxu0 %v651
    %886 = vmatprep.subr.bf16.mxu0 %v654
    %887 = vmatpush1.bf16.msra.mxu0 %v653
    %888 = vmatprep.subr.bf16.mxu0 %v656
    %889 = vmatpush1.bf16.msra.mxu0 %v655
    %890 = vmatprep.subr.bf16.mxu0 %v658
    %891 = vmatpush1.bf16.msra.mxu0 %v657
    %892 = vmatprep.subr.bf16.mxu0 %v660
    %893 = vmatpush1.bf16.msra.mxu0 %v659
    %894 = vmatprep.subr.bf16.mxu0 %v662
    %895 = vmatpush1.bf16.msra.mxu0 %v661
    %896 = vmatprep.subr.bf16.mxu0 %v664
    %897 = vmatpush1.bf16.msra.mxu0 %v663
    %898 = vmatprep.subr.bf16.mxu0 %v666
    %899 = vmatpush1.bf16.msra.mxu0 %v665
    %900 = vmatprep.subr.bf16.mxu0 %v668
    %901 = vmatpush1.bf16.msra.mxu0 %v667
    %902 = vmatprep.subr.bf16.mxu0 %v670
    %903 = vmatpush1.bf16.msra.mxu0 %v669
    %904 = vmatprep.subr.bf16.mxu0 %v672
    %905 = vmatpush1.bf16.msra.mxu0 %v671
    %906 = vmatprep.subr.bf16.mxu0 %v674
    %907 = vmatpush1.bf16.msra.mxu0 %v673
    %908 = vmatprep.subr.bf16.mxu0 %v676
    %909 = vmatpush1.bf16.msra.mxu0 %v675
    %910 = vmatprep.mubr.bf16.mxu0 %v262
    %911 = vmatmul.mubr.bf16.gmra.mrb[0].mxu0 %v261
    %v912 = vpop.f32.mrb[0].mxu0
    %v913 = vadd.f32 %v872, %v912
    %v914 = vpop.f32.mrb[0].mxu0
    %v915 = vadd.f32 %v874, %v914
    %v916 = vpop.f32.mrb[0].mxu0
    %v917 = vpop.f32.mrb[0].mxu0
    %918 = vdwg.mxu0
    %919 = vmatprep.subr.bf16.mxu0 %v678
    %920 = vmatpush1.bf16.msra.mxu0 %v677
    %921 = vmatprep.subr.bf16.mxu0 %v680
    %922 = vmatpush1.bf16.msra.mxu0 %v679
    %923 = vmatprep.subr.bf16.mxu0 %v682
    %924 = vmatpush1.bf16.msra.mxu0 %v681
    %925 = vmatprep.subr.bf16.mxu0 %v684
    %926 = vmatpush1.bf16.msra.mxu0 %v683
    %927 = vmatprep.subr.bf16.mxu0 %v686
    %928 = vmatpush1.bf16.msra.mxu0 %v685
    %929 = vmatprep.subr.bf16.mxu0 %v688
    %930 = vmatpush1.bf16.msra.mxu0 %v687
    %931 = vmatprep.subr.bf16.mxu0 %v690
    %932 = vmatpush1.bf16.msra.mxu0 %v689
    %933 = vmatprep.subr.bf16.mxu0 %v692
    %934 = vmatpush1.bf16.msra.mxu0 %v691
    %935 = vmatprep.subr.bf16.mxu0 %v694
    %936 = vmatpush1.bf16.msra.mxu0 %v693
    %937 = vmatprep.subr.bf16.mxu0 %v696
    %938 = vmatpush1.bf16.msra.mxu0 %v695
    %939 = vmatprep.subr.bf16.mxu0 %v698
    %940 = vmatpush1.bf16.msra.mxu0 %v697
    %941 = vmatprep.subr.bf16.mxu0 %v700
    %942 = vmatpush1.bf16.msra.mxu0 %v699
    %943 = vmatprep.subr.bf16.mxu0 %v702
    %944 = vmatpush1.bf16.msra.mxu0 %v701
    %945 = vmatprep.subr.bf16.mxu0 %v704
    %946 = vmatpush1.bf16.msra.mxu0 %v703
    %947 = vmatprep.subr.bf16.mxu0 %v706
    %948 = vmatpush1.bf16.msra.mxu0 %v705
    %949 = vmatprep.subr.bf16.mxu0 %v708
    %950 = vmatpush1.bf16.msra.mxu0 %v707
    %951 = vmatprep.mubr.bf16.mxu0 %v264
    %952 = vmatmul.mubr.bf16.gmra.mrb[0].mxu0 %v263
    %v953 = vpop.f32.mrb[0].mxu0
    %v954 = vadd.f32 %v913, %v953
    %v955 = vpop.f32.mrb[0].mxu0
    %v956 = vadd.f32 %v915, %v955
    %v957 = vpop.f32.mrb[0].mxu0
    %v958 = vpop.f32.mrb[0].mxu0
    %959 = vdwg.mxu0
    %960 = vmatprep.subr.bf16.mxu0 %v710
    %961 = vmatpush1.bf16.msra.mxu0 %v709
    %962 = vmatprep.subr.bf16.mxu0 %v712
    %963 = vmatpush1.bf16.msra.mxu0 %v711
    %964 = vmatprep.subr.bf16.mxu0 %v714
    %965 = vmatpush1.bf16.msra.mxu0 %v713
    %966 = vmatprep.subr.bf16.mxu0 %v716
    %967 = vmatpush1.bf16.msra.mxu0 %v715
    %968 = vmatprep.subr.bf16.mxu0 %v718
    %969 = vmatpush1.bf16.msra.mxu0 %v717
    %970 = vmatprep.subr.bf16.mxu0 %v720
    %971 = vmatpush1.bf16.msra.mxu0 %v719
    %972 = vmatprep.subr.bf16.mxu0 %v722
    %973 = vmatpush1.bf16.msra.mxu0 %v721
    %974 = vmatprep.subr.bf16.mxu0 %v724
    %975 = vmatpush1.bf16.msra.mxu0 %v723
    %976 = vmatprep.subr.bf16.mxu0 0
    %977 = vmatpush1.bf16.msra.mxu0 0
    %978 = vmatprep.subr.bf16.mxu0 0
    %979 = vmatpush1.bf16.msra.mxu0 0
    %980 = vmatprep.subr.bf16.mxu0 0
    %981 = vmatpush1.bf16.msra.mxu0 0
    %982 = vmatprep.subr.bf16.mxu0 0
    %983 = vmatpush1.bf16.msra.mxu0 0
    %984 = vmatprep.subr.bf16.mxu0 0
    %985 = vmatpush1.bf16.msra.mxu0 0
    %986 = vmatprep.subr.bf16.mxu0 0
    %987 = vmatpush1.bf16.msra.mxu0 0
    %988 = vmatprep.subr.bf16.mxu0 0
    %989 = vmatpush1.bf16.msra.mxu0 0
    %990 = vmatprep.subr.bf16.mxu0 0
    %991 = vmatpush1.bf16.msra.mxu0 0
    %992 = vmatprep.mubr.bf16.mxu0 0
    %993 = vmatmul.mubr.bf16.gmra.mrb[0].mxu0 %v265
    %v994 = vpop.f32.mrb[0].mxu0
    %v995 = vadd.f32 %v954, %v994
    %v996 = vpop.f32.mrb[0].mxu0
    %v997 = vadd.f32 %v956, %v996
    %v998 = vpop.f32.mrb[0].mxu0
    %v999 = vpop.f32.mrb[0].mxu0
    %1000 = vdwg.mxu0
    %v1001 = vmax.f32 %v995, 0.0
    %v1002 = vmax.f32 %v997, 0.0
    %v1003 = vld [vmem:[#allocation7] sm:$0xf]
    %v1004 = vld [vmem:[#allocation7 + $0x4] sm:$0xf]
    %v1005 = vld [vmem:[#allocation7 + $0x8] sm:$0xf]
    %v1006 = vld [vmem:[#allocation7 + $0xc] sm:$0xf]
    %v1007 = vld [vmem:[#allocation7 + $0x10] sm:$0xf]
    %v1008 = vld [vmem:[#allocation7 + $0x14] sm:$0xf]
    %v1009 = vld [vmem:[#allocation7 + $0x18] sm:$0xf]
    %v1010 = vld [vmem:[#allocation7 + $0x1c] sm:$0xf]
    %v1011 = vld [vmem:[#allocation7 + $0x20] sm:$0xf]
    %v1012 = vld [vmem:[#allocation7 + $0x24] sm:$0xf]
    %v1013 = vld [vmem:[#allocation7 + $0x28] sm:$0xf]
    %v1014 = vld [vmem:[#allocation7 + $0x2c] sm:$0xf]
    %v1015 = vld [vmem:[#allocation7 + $0x30] sm:$0xf]
    %v1016 = vld [vmem:[#allocation7 + $0x34] sm:$0xf]
    %v1017 = vld [vmem:[#allocation7 + $0x38] sm:$0xf]
    %v1018 = vld [vmem:[#allocation7 + $0x3c] sm:$0xf]
    %v1019 = vld [vmem:[#allocation7 + $0x40] sm:$0xf]
    %v1020 = vld [vmem:[#allocation7 + $0x44] sm:$0xf]
    %v1021 = vld [vmem:[#allocation7 + $0x48] sm:$0xf]
    %v1022 = vld [vmem:[#allocation7 + $0x4c] sm:$0xf]
    %v1023 = vld [vmem:[#allocation7 + $0x50] sm:$0xf]
    %v1024 = vld [vmem:[#allocation7 + $0x54] sm:$0xf]
    %v1025 = vld [vmem:[#allocation7 + $0x58] sm:$0xf]
    %v1026 = vld [vmem:[#allocation7 + $0x5c] sm:$0xf]
    %v1027 = vld [vmem:[#allocation7 + $0x60] sm:$0xf]
    %v1028 = vld [vmem:[#allocation7 + $0x64] sm:$0xf]
    %v1029 = vld [vmem:[#allocation7 + $0x68] sm:$0xf]
    %v1030 = vld [vmem:[#allocation7 + $0x6c] sm:$0xf]
    %v1031 = vld [vmem:[#allocation7 + $0x70] sm:$0xf]
    %v1032 = vld [vmem:[#allocation7 + $0x74] sm:$0xf]
    %v1033 = vld [vmem:[#allocation7 + $0x78] sm:$0xf]
    %v1034 = vld [vmem:[#allocation7 + $0x7c] sm:$0xf]
    %v1035 = vld [vmem:[%s4] sm:$0x1]
    %v1036 = vpack.c.bf16 %v1001, %v1001
    %v1037 = vpack.c.bf16 %v1002, %v1002
    %v1039 = vlaneseq
    %v1040 = vshrl.u32 %v1039, 7
    %v1041 = vsub.s32 0, %v1040
    %v1042 = vrot.slane %v1035, %v1041
    %v1076 = vunpack.c.l.b16 %v1003
    %v1077 = vunpack.c.l.b16 %v1004
    %v1078 = vunpack.c.l.b16 %v1005
    %v1079 = vunpack.c.l.b16 %v1006
    %v1080 = vunpack.c.l.b16 %v1007
    %v1081 = vunpack.c.l.b16 %v1008
    %v1082 = vunpack.c.l.b16 %v1009
    %v1083 = vunpack.c.l.b16 %v1010
    %v1084 = vunpack.c.l.b16 %v1011
    %v1085 = vunpack.c.l.b16 %v1012
    %v1086 = vunpack.c.l.b16 %v1013
    %v1087 = vunpack.c.l.b16 %v1014
    %v1088 = vunpack.c.l.b16 %v1015
    %v1089 = vunpack.c.l.b16 %v1016
    %v1090 = vunpack.c.l.b16 %v1017
    %v1091 = vunpack.c.l.b16 %v1018
    %v1092 = vunpack.c.l.b16 %v1019
    %v1093 = vunpack.c.l.b16 %v1020
    %v1094 = vunpack.c.l.b16 %v1021
    %v1095 = vunpack.c.l.b16 %v1022
    %v1096 = vunpack.c.l.b16 %v1023
    %v1097 = vunpack.c.l.b16 %v1024
    %v1098 = vunpack.c.l.b16 %v1025
    %v1099 = vunpack.c.l.b16 %v1026
    %v1100 = vunpack.c.l.b16 %v1027
    %v1101 = vunpack.c.l.b16 %v1028
    %v1102 = vunpack.c.l.b16 %v1029
    %v1103 = vunpack.c.l.b16 %v1030
    %v1104 = vunpack.c.l.b16 %v1031
    %v1105 = vunpack.c.l.b16 %v1032
    %v1106 = vunpack.c.l.b16 %v1033
    %v1107 = vunpack.c.l.b16 %v1034
    %v1108 = vpack.c.b16 %v1077, %v1076
    %v1109 = vpack.c.b16 %v1079, %v1078
    %v1110 = vpack.c.b16 %v1081, %v1080
    %v1111 = vpack.c.b16 %v1083, %v1082
    %v1112 = vpack.c.b16 %v1085, %v1084
    %v1113 = vpack.c.b16 %v1087, %v1086
    %v1114 = vpack.c.b16 %v1089, %v1088
    %v1115 = vpack.c.b16 %v1091, %v1090
    %v1116 = vpack.c.b16 %v1093, %v1092
    %v1117 = vpack.c.b16 %v1095, %v1094
    %v1118 = vpack.c.b16 %v1097, %v1096
    %v1119 = vpack.c.b16 %v1099, %v1098
    %v1120 = vpack.c.b16 %v1101, %v1100
    %v1121 = vpack.c.b16 %v1103, %v1102
    %v1122 = vpack.c.b16 %v1105, %v1104
    %v1123 = vpack.c.b16 %v1107, %v1106
    %1140 = vmatprep.subr.bf16.mxu0 0
    %1141 = vmatpush1.bf16.msra.mxu0 %v1108
    %1142 = vmatprep.subr.bf16.mxu0 0
    %1143 = vmatpush1.bf16.msra.mxu0 %v1109
    %1144 = vmatprep.subr.bf16.mxu0 0
    %1145 = vmatpush1.bf16.msra.mxu0 %v1110
    %1146 = vmatprep.subr.bf16.mxu0 0
    %1147 = vmatpush1.bf16.msra.mxu0 %v1111
    %1148 = vmatprep.subr.bf16.mxu0 0
    %1149 = vmatpush1.bf16.msra.mxu0 %v1112
    %1150 = vmatprep.subr.bf16.mxu0 0
    %1151 = vmatpush1.bf16.msra.mxu0 %v1113
    %1152 = vmatprep.subr.bf16.mxu0 0
    %1153 = vmatpush1.bf16.msra.mxu0 %v1114
    %1154 = vmatprep.subr.bf16.mxu0 0
    %1155 = vmatpush1.bf16.msra.mxu0 %v1115
    %1156 = vmatprep.subr.bf16.mxu0 0
    %1157 = vmatpush1.bf16.msra.mxu0 %v1116
    %1158 = vmatprep.subr.bf16.mxu0 0
    %1159 = vmatpush1.bf16.msra.mxu0 %v1117
    %1160 = vmatprep.subr.bf16.mxu0 0
    %1161 = vmatpush1.bf16.msra.mxu0 %v1118
    %1162 = vmatprep.subr.bf16.mxu0 0
    %1163 = vmatpush1.bf16.msra.mxu0 %v1119
    %1164 = vmatprep.subr.bf16.mxu0 0
    %1165 = vmatpush1.bf16.msra.mxu0 %v1120
    %1166 = vmatprep.subr.bf16.mxu0 0
    %1167 = vmatpush1.bf16.msra.mxu0 %v1121
    %1168 = vmatprep.subr.bf16.mxu0 0
    %1169 = vmatpush1.bf16.msra.mxu0 %v1122
    %1170 = vmatprep.subr.bf16.mxu0 0
    %1171 = vmatpush1.bf16.msra.mxu0 %v1123
    %1172 = vmatprep.mubr.bf16.mxu0 %v1037
    %1173 = vmatmul.mubr.bf16.gmra.mrb[0].mxu0 %v1036
    %v1174 = vpop.f32.mrb[0].mxu0
    %v1175 = vadd.f32 %v1042, %v1174
    %v1176 = vpop.f32.mrb[0].mxu0
    %v1177 = vpop.f32.mrb[0].mxu0
    %v1178 = vpop.f32.mrb[0].mxu0
    %1179 = vdwg.mxu0
    %v1180 = vmax.f32 %v1175, 0.0
    %v1181 = vld [vmem:[#allocation8] sm:$0xf]
    %v1182 = vld [vmem:[#allocation8 + $0x4] sm:$0xf]
    %v1183 = vld [vmem:[#allocation8 + $0x8] sm:$0xf]
    %v1184 = vld [vmem:[#allocation8 + $0xc] sm:$0xf]
    %v1185 = vld [vmem:[#allocation8 + $0x10] sm:$0xf]
    %v1186 = vld [vmem:[#allocation8 + $0x14] sm:$0xf]
    %v1187 = vld [vmem:[#allocation8 + $0x18] sm:$0xf]
    %v1188 = vld [vmem:[#allocation8 + $0x1c] sm:$0xf]
    %v1189 = vld [vmem:[#allocation8 + $0x20] sm:$0xf]
    %v1190 = vld [vmem:[#allocation8 + $0x24] sm:$0xf]
    %v1191 = vld [vmem:[#allocation8 + $0x28] sm:$0xf]
    %v1192 = vld [vmem:[#allocation8 + $0x2c] sm:$0xf]
    %v1193 = vld [vmem:[#allocation8 + $0x30] sm:$0xf]
    %v1194 = vld [vmem:[#allocation8 + $0x34] sm:$0xf]
    %v1195 = vld [vmem:[#allocation8 + $0x38] sm:$0xf]
    %v1196 = vld [vmem:[#allocation8 + $0x3c] sm:$0xf]
    %v1197 = vld [vmem:[%s6] sm:$0x1]
    %v1198 = vpack.c.bf16 %v1180, %v1180
    %v1200 = vlaneseq
    %v1201 = vshrl.u32 %v1200, 7
    %v1202 = vsub.s32 0, %v1201
    %v1203 = vrot.slane %v1197, %v1202
    %v1221 = vunpack.c.l.b16 %v1181
    %v1222 = vunpack.c.l.b16 %v1182
    %v1223 = vunpack.c.l.b16 %v1183
    %v1224 = vunpack.c.l.b16 %v1184
    %v1225 = vunpack.c.l.b16 %v1185
    %v1226 = vunpack.c.l.b16 %v1186
    %v1227 = vunpack.c.l.b16 %v1187
    %v1228 = vunpack.c.l.b16 %v1188
    %v1229 = vunpack.c.l.b16 %v1189
    %v1230 = vunpack.c.l.b16 %v1190
    %v1231 = vunpack.c.l.b16 %v1191
    %v1232 = vunpack.c.l.b16 %v1192
    %v1233 = vunpack.c.l.b16 %v1193
    %v1234 = vunpack.c.l.b16 %v1194
    %v1235 = vunpack.c.l.b16 %v1195
    %v1236 = vunpack.c.l.b16 %v1196
    %v1237 = vpack.c.b16 %v1222, %v1221
    %v1238 = vpack.c.b16 %v1224, %v1223
    %v1239 = vpack.c.b16 %v1226, %v1225
    %v1240 = vpack.c.b16 %v1228, %v1227
    %v1241 = vpack.c.b16 %v1230, %v1229
    %v1242 = vpack.c.b16 %v1232, %v1231
    %v1243 = vpack.c.b16 %v1234, %v1233
    %v1244 = vpack.c.b16 %v1236, %v1235
    %1253 = vmatprep.subr.bf16.mxu0 0
    %1254 = vmatpush1.bf16.msra.mxu0 %v1237
    %1255 = vmatprep.subr.bf16.mxu0 0
    %1256 = vmatpush1.bf16.msra.mxu0 %v1238
    %1257 = vmatprep.subr.bf16.mxu0 0
    %1258 = vmatpush1.bf16.msra.mxu0 %v1239
    %1259 = vmatprep.subr.bf16.mxu0 0
    %1260 = vmatpush1.bf16.msra.mxu0 %v1240
    %1261 = vmatprep.subr.bf16.mxu0 0
    %1262 = vmatpush1.bf16.msra.mxu0 %v1241
    %1263 = vmatprep.subr.bf16.mxu0 0
    %1264 = vmatpush1.bf16.msra.mxu0 %v1242
    %1265 = vmatprep.subr.bf16.mxu0 0
    %1266 = vmatpush1.bf16.msra.mxu0 %v1243
    %1267 = vmatprep.subr.bf16.mxu0 0
    %1268 = vmatpush1.bf16.msra.mxu0 %v1244
    %1269 = vmatprep.subr.bf16.mxu0 0
    %1270 = vmatpush1.bf16.msra.mxu0 0
    %1271 = vmatprep.subr.bf16.mxu0 0
    %1272 = vmatpush1.bf16.msra.mxu0 0
    %1273 = vmatprep.subr.bf16.mxu0 0
    %1274 = vmatpush1.bf16.msra.mxu0 0
    %1275 = vmatprep.subr.bf16.mxu0 0
    %1276 = vmatpush1.bf16.msra.mxu0 0
    %1277 = vmatprep.subr.bf16.mxu0 0
    %1278 = vmatpush1.bf16.msra.mxu0 0
    %1279 = vmatprep.subr.bf16.mxu0 0
    %1280 = vmatpush1.bf16.msra.mxu0 0
    %1281 = vmatprep.subr.bf16.mxu0 0
    %1282 = vmatpush1.bf16.msra.mxu0 0
    %1283 = vmatprep.subr.bf16.mxu0 0
    %1284 = vmatpush1.bf16.msra.mxu0 0
    %1285 = vmatprep.mubr.bf16.mxu0 0
    %1286 = vmatmul.mubr.bf16.gmra.mrb[0].mxu0 %v1198
    %v1287 = vpop.f32.mrb[0].mxu0
    %v1288 = vadd.f32 %v1203, %v1287
    %v1289 = vpop.f32.mrb[0].mxu0
    %v1290 = vpop.f32.mrb[0].mxu0
    %v1291 = vpop.f32.mrb[0].mxu0
    %1292 = vdwg.mxu0
    %v1293 = vmax.f32 %v1288, 0.0
    %v1294 = vld [vmem:[#allocation10] sm:$0xf]
    %v1295 = vld [vmem:[#allocation10 + $0x4] sm:$0xf]
    %v1296 = vld [vmem:[#allocation10 + $0x8] sm:$0xf]
    %v1297 = vld [vmem:[#allocation10 + $0xc] sm:$0xf]
    %v1298 = vld [vmem:[#allocation10 + $0x10] sm:$0xf]
    %v1299 = vld [vmem:[#allocation10 + $0x14] sm:$0xf]
    %v1300 = vld [vmem:[#allocation10 + $0x18] sm:$0xf]
    %v1301 = vld [vmem:[#allocation10 + $0x1c] sm:$0xf]
    %v1302 = vld [vmem:[#allocation10 + $0x20] sm:$0xf]
    %v1303 = vld [vmem:[#allocation10 + $0x24] sm:$0xf]
    %v1304 = vld [vmem:[#allocation10 + $0x28] sm:$0xf]
    %v1305 = vld [vmem:[#allocation10 + $0x2c] sm:$0xf]
    %v1306 = vld [vmem:[#allocation10 + $0x30] sm:$0xf]
    %v1307 = vld [vmem:[#allocation10 + $0x34] sm:$0xf]
    %v1308 = vld [vmem:[#allocation10 + $0x38] sm:$0xf]
    %v1309 = vld [vmem:[#allocation10 + $0x3c] sm:$0xf]
    %v1310 = vld [vmem:[%s8] sm:$0x1]
    %v1311 = vpack.c.bf16 %v1293, %v1293
    %v1313 = vlaneseq
    %v1314 = vshrl.u32 %v1313, 7
    %v1315 = vsub.s32 0, %v1314
    %v1316 = vrot.slane %v1310, %v1315
    %v1334 = vunpack.c.l.b16 %v1294
    %v1335 = vunpack.c.l.b16 %v1295
    %v1336 = vunpack.c.l.b16 %v1296
    %v1337 = vunpack.c.l.b16 %v1297
    %v1338 = vunpack.c.l.b16 %v1298
    %v1339 = vunpack.c.l.b16 %v1299
    %v1340 = vunpack.c.l.b16 %v1300
    %v1341 = vunpack.c.l.b16 %v1301
    %v1342 = vunpack.c.l.b16 %v1302
    %v1343 = vunpack.c.l.b16 %v1303
    %v1344 = vunpack.c.l.b16 %v1304
    %v1345 = vunpack.c.l.b16 %v1305
    %v1346 = vunpack.c.l.b16 %v1306
    %v1347 = vunpack.c.l.b16 %v1307
    %v1348 = vunpack.c.l.b16 %v1308
    %v1349 = vunpack.c.l.b16 %v1309
    %v1350 = vpack.c.b16 %v1335, %v1334
    %v1351 = vpack.c.b16 %v1337, %v1336
    %v1352 = vpack.c.b16 %v1339, %v1338
    %v1353 = vpack.c.b16 %v1341, %v1340
    %v1354 = vpack.c.b16 %v1343, %v1342
    %v1355 = vpack.c.b16 %v1345, %v1344
    %v1356 = vpack.c.b16 %v1347, %v1346
    %v1357 = vpack.c.b16 %v1349, %v1348
    %1366 = vmatprep.subr.bf16.mxu0 0
    %1367 = vmatpush1.bf16.msra.mxu0 %v1350
    %1368 = vmatprep.subr.bf16.mxu0 0
    %1369 = vmatpush1.bf16.msra.mxu0 %v1351
    %1370 = vmatprep.subr.bf16.mxu0 0
    %1371 = vmatpush1.bf16.msra.mxu0 %v1352
    %1372 = vmatprep.subr.bf16.mxu0 0
    %1373 = vmatpush1.bf16.msra.mxu0 %v1353
    %1374 = vmatprep.subr.bf16.mxu0 0
    %1375 = vmatpush1.bf16.msra.mxu0 %v1354
    %1376 = vmatprep.subr.bf16.mxu0 0
    %1377 = vmatpush1.bf16.msra.mxu0 %v1355
    %1378 = vmatprep.subr.bf16.mxu0 0
    %1379 = vmatpush1.bf16.msra.mxu0 %v1356
    %1380 = vmatprep.subr.bf16.mxu0 0
    %1381 = vmatpush1.bf16.msra.mxu0 %v1357
    %1382 = vmatprep.subr.bf16.mxu0 0
    %1383 = vmatpush1.bf16.msra.mxu0 0
    %1384 = vmatprep.subr.bf16.mxu0 0
    %1385 = vmatpush1.bf16.msra.mxu0 0
    %1386 = vmatprep.subr.bf16.mxu0 0
    %1387 = vmatpush1.bf16.msra.mxu0 0
    %1388 = vmatprep.subr.bf16.mxu0 0
    %1389 = vmatpush1.bf16.msra.mxu0 0
    %1390 = vmatprep.subr.bf16.mxu0 0
    %1391 = vmatpush1.bf16.msra.mxu0 0
    %1392 = vmatprep.subr.bf16.mxu0 0
    %1393 = vmatpush1.bf16.msra.mxu0 0
    %1394 = vmatprep.subr.bf16.mxu0 0
    %1395 = vmatpush1.bf16.msra.mxu0 0
    %1396 = vmatprep.subr.bf16.mxu0 0
    %1397 = vmatpush1.bf16.msra.mxu0 0
    %1398 = vmatprep.mubr.bf16.mxu0 0
    %1399 = vmatmul.mubr.bf16.gmra.mrb[0].mxu0 %v1311
    %v1400 = vpop.f32.mrb[0].mxu0
    %v1401 = vadd.f32 %v1316, %v1400
    %v1402 = vpop.f32.mrb[0].mxu0
    %v1403 = vpop.f32.mrb[0].mxu0
    %v1404 = vpop.f32.mrb[0].mxu0
    %1405 = vdwg.mxu0
    %v1406 = vmax.f32 %v1401, 0.0
    %v1407 = vld [vmem:[#allocation11] sm:$0xf]
    %v1408 = vld [vmem:[#allocation11 + $0x4] sm:$0xf]
    %v1409 = vld [vmem:[#allocation11 + $0x8] sm:$0xf]
    %v1410 = vld [vmem:[#allocation11 + $0xc] sm:$0xf]
    %v1411 = vld [vmem:[#allocation11 + $0x10] sm:$0xf]
    %v1412 = vld [vmem:[#allocation11 + $0x14] sm:$0xf]
    %v1413 = vld [vmem:[#allocation11 + $0x18] sm:$0xf]
    %v1414 = vld [vmem:[#allocation11 + $0x1c] sm:$0xf]
    %v1415 = vld [vmem:[#allocation11 + $0x20] sm:$0xf]
    %v1416 = vld [vmem:[#allocation11 + $0x24] sm:$0xf]
    %v1417 = vld [vmem:[#allocation11 + $0x28] sm:$0xf]
    %v1418 = vld [vmem:[#allocation11 + $0x2c] sm:$0xf]
    %v1419 = vld [vmem:[#allocation11 + $0x30] sm:$0xf]
    %v1420 = vld [vmem:[#allocation11 + $0x34] sm:$0xf]
    %v1421 = vld [vmem:[#allocation11 + $0x38] sm:$0xf]
    %v1422 = vld [vmem:[#allocation11 + $0x3c] sm:$0xf]
    %v1423 = vld [vmem:[%s10] sm:$0x1]
    %v1424 = vpack.c.bf16 %v1406, %v1406
    %v1426 = vlaneseq
    %v1427 = vshrl.u32 %v1426, 7
    %v1428 = vsub.s32 0, %v1427
    %v1429 = vrot.slane %v1423, %v1428
    %v1447 = vunpack.c.l.b16 %v1407
    %v1448 = vunpack.c.l.b16 %v1408
    %v1449 = vunpack.c.l.b16 %v1409
    %v1450 = vunpack.c.l.b16 %v1410
    %v1451 = vunpack.c.l.b16 %v1411
    %v1452 = vunpack.c.l.b16 %v1412
    %v1453 = vunpack.c.l.b16 %v1413
    %v1454 = vunpack.c.l.b16 %v1414
    %v1455 = vunpack.c.l.b16 %v1415
    %v1456 = vunpack.c.l.b16 %v1416
    %v1457 = vunpack.c.l.b16 %v1417
    %v1458 = vunpack.c.l.b16 %v1418
    %v1459 = vunpack.c.l.b16 %v1419
    %v1460 = vunpack.c.l.b16 %v1420
    %v1461 = vunpack.c.l.b16 %v1421
    %v1462 = vunpack.c.l.b16 %v1422
    %v1463 = vpack.c.b16 %v1448, %v1447
    %v1464 = vpack.c.b16 %v1450, %v1449
    %v1465 = vpack.c.b16 %v1452, %v1451
    %v1466 = vpack.c.b16 %v1454, %v1453
    %v1467 = vpack.c.b16 %v1456, %v1455
    %v1468 = vpack.c.b16 %v1458, %v1457
    %v1469 = vpack.c.b16 %v1460, %v1459
    %v1470 = vpack.c.b16 %v1462, %v1461
    %1479 = vmatprep.subr.bf16.mxu0 0
    %1480 = vmatpush1.bf16.msra.mxu0 %v1463
    %1481 = vmatprep.subr.bf16.mxu0 0
    %1482 = vmatpush1.bf16.msra.mxu0 %v1464
    %1483 = vmatprep.subr.bf16.mxu0 0
    %1484 = vmatpush1.bf16.msra.mxu0 %v1465
    %1485 = vmatprep.subr.bf16.mxu0 0
    %1486 = vmatpush1.bf16.msra.mxu0 %v1466
    %1487 = vmatprep.subr.bf16.mxu0 0
    %1488 = vmatpush1.bf16.msra.mxu0 %v1467
    %1489 = vmatprep.subr.bf16.mxu0 0
    %1490 = vmatpush1.bf16.msra.mxu0 %v1468
    %1491 = vmatprep.subr.bf16.mxu0 0
    %1492 = vmatpush1.bf16.msra.mxu0 %v1469
    %1493 = vmatprep.subr.bf16.mxu0 0
    %1494 = vmatpush1.bf16.msra.mxu0 %v1470
    %1495 = vmatprep.subr.bf16.mxu0 0
    %1496 = vmatpush1.bf16.msra.mxu0 0
    %1497 = vmatprep.subr.bf16.mxu0 0
    %1498 = vmatpush1.bf16.msra.mxu0 0
    %1499 = vmatprep.subr.bf16.mxu0 0
    %1500 = vmatpush1.bf16.msra.mxu0 0
    %1501 = vmatprep.subr.bf16.mxu0 0
    %1502 = vmatpush1.bf16.msra.mxu0 0
    %1503 = vmatprep.subr.bf16.mxu0 0
    %1504 = vmatpush1.bf16.msra.mxu0 0
    %1505 = vmatprep.subr.bf16.mxu0 0
    %1506 = vmatpush1.bf16.msra.mxu0 0
    %1507 = vmatprep.subr.bf16.mxu0 0
    %1508 = vmatpush1.bf16.msra.mxu0 0
    %1509 = vmatprep.subr.bf16.mxu0 0
    %1510 = vmatpush1.bf16.msra.mxu0 0
    %1511 = vmatprep.mubr.bf16.mxu0 0
    %1512 = vmatmul.mubr.bf16.gmra.mrb[0].mxu0 %v1424
    %v1513 = vpop.f32.mrb[0].mxu0
    %v1514 = vadd.f32 %v1429, %v1513
    %v1515 = vpop.f32.mrb[0].mxu0
    %v1516 = vpop.f32.mrb[0].mxu0
    %v1517 = vpop.f32.mrb[0].mxu0
    %1518 = vdwg.mxu0
    %v1519 = vmax.f32 %v1514, 0.0
    %v1520 = vld [vmem:[#allocation13] sm:$0xf]
    %v1521 = vld [vmem:[#allocation13 + $0x4] sm:$0xf]
    %v1522 = vld [vmem:[#allocation13 + $0x8] sm:$0xf]
    %v1523 = vld [vmem:[#allocation13 + $0xc] sm:$0xf]
    %v1524 = vld [vmem:[#allocation13 + $0x10] sm:$0xf]
    %v1525 = vld [vmem:[#allocation13 + $0x14] sm:$0xf]
    %v1526 = vld [vmem:[#allocation13 + $0x18] sm:$0xf]
    %v1527 = vld [vmem:[#allocation13 + $0x1c] sm:$0xf]
    %v1528 = vld [vmem:[#allocation13 + $0x20] sm:$0xf]
    %v1529 = vld [vmem:[#allocation13 + $0x24] sm:$0xf]
    %v1530 = vld [vmem:[#allocation13 + $0x28] sm:$0xf]
    %v1531 = vld [vmem:[#allocation13 + $0x2c] sm:$0xf]
    %v1532 = vld [vmem:[#allocation13 + $0x30] sm:$0xf]
    %v1533 = vld [vmem:[#allocation13 + $0x34] sm:$0xf]
    %v1534 = vld [vmem:[#allocation13 + $0x38] sm:$0xf]
    %v1535 = vld [vmem:[#allocation13 + $0x3c] sm:$0xf]
    %v1536 = vld [vmem:[%s12] sm:$0x1]
    %v1537 = vpack.c.bf16 %v1519, %v1519
    %v1539 = vlaneseq
    %v1540 = vshrl.u32 %v1539, 7
    %v1541 = vsub.s32 0, %v1540
    %v1542 = vrot.slane %v1536, %v1541
    %v1560 = vunpack.c.l.b16 %v1520
    %v1561 = vunpack.c.l.b16 %v1521
    %v1562 = vunpack.c.l.b16 %v1522
    %v1563 = vunpack.c.l.b16 %v1523
    %v1564 = vunpack.c.l.b16 %v1524
    %v1565 = vunpack.c.l.b16 %v1525
    %v1566 = vunpack.c.l.b16 %v1526
    %v1567 = vunpack.c.l.b16 %v1527
    %v1568 = vunpack.c.l.b16 %v1528
    %v1569 = vunpack.c.l.b16 %v1529
    %v1570 = vunpack.c.l.b16 %v1530
    %v1571 = vunpack.c.l.b16 %v1531
    %v1572 = vunpack.c.l.b16 %v1532
    %v1573 = vunpack.c.l.b16 %v1533
    %v1574 = vunpack.c.l.b16 %v1534
    %v1575 = vunpack.c.l.b16 %v1535
    %v1576 = vpack.c.b16 %v1561, %v1560
    %v1577 = vpack.c.b16 %v1563, %v1562
    %v1578 = vpack.c.b16 %v1565, %v1564
    %v1579 = vpack.c.b16 %v1567, %v1566
    %v1580 = vpack.c.b16 %v1569, %v1568
    %v1581 = vpack.c.b16 %v1571, %v1570
    %v1582 = vpack.c.b16 %v1573, %v1572
    %v1583 = vpack.c.b16 %v1575, %v1574
    %1592 = vmatprep.subr.bf16.mxu0 0
    %1593 = vmatpush1.bf16.msra.mxu0 %v1576
    %1594 = vmatprep.subr.bf16.mxu0 0
    %1595 = vmatpush1.bf16.msra.mxu0 %v1577
    %1596 = vmatprep.subr.bf16.mxu0 0
    %1597 = vmatpush1.bf16.msra.mxu0 %v1578
    %1598 = vmatprep.subr.bf16.mxu0 0
    %1599 = vmatpush1.bf16.msra.mxu0 %v1579
    %1600 = vmatprep.subr.bf16.mxu0 0
    %1601 = vmatpush1.bf16.msra.mxu0 %v1580
    %1602 = vmatprep.subr.bf16.mxu0 0
    %1603 = vmatpush1.bf16.msra.mxu0 %v1581
    %1604 = vmatprep.subr.bf16.mxu0 0
    %1605 = vmatpush1.bf16.msra.mxu0 %v1582
    %1606 = vmatprep.subr.bf16.mxu0 0
    %1607 = vmatpush1.bf16.msra.mxu0 %v1583
    %1608 = vmatprep.subr.bf16.mxu0 0
    %1609 = vmatpush1.bf16.msra.mxu0 0
    %1610 = vmatprep.subr.bf16.mxu0 0
    %1611 = vmatpush1.bf16.msra.mxu0 0
    %1612 = vmatprep.subr.bf16.mxu0 0
    %1613 = vmatpush1.bf16.msra.mxu0 0
    %1614 = vmatprep.subr.bf16.mxu0 0
    %1615 = vmatpush1.bf16.msra.mxu0 0
    %1616 = vmatprep.subr.bf16.mxu0 0
    %1617 = vmatpush1.bf16.msra.mxu0 0
    %1618 = vmatprep.subr.bf16.mxu0 0
    %1619 = vmatpush1.bf16.msra.mxu0 0
    %1620 = vmatprep.subr.bf16.mxu0 0
    %1621 = vmatpush1.bf16.msra.mxu0 0
    %1622 = vmatprep.subr.bf16.mxu0 0
    %1623 = vmatpush1.bf16.msra.mxu0 0
    %1624 = vmatprep.mubr.bf16.mxu0 0
    %1625 = vmatmul.mubr.bf16.gmra.mrb[0].mxu0 %v1537
    %v1626 = vpop.f32.mrb[0].mxu0
    %v1627 = vadd.f32 %v1542, %v1626
    %v1628 = vpop.f32.mrb[0].mxu0
    %v1629 = vpop.f32.mrb[0].mxu0
    %v1630 = vpop.f32.mrb[0].mxu0
    %1631 = vdwg.mxu0
    %1632 = vst [vmem:[#allocation14] sm:$0xff] %v1627
    // Predicated region
    $region82: #{tpu_custom_call.1} parent=1 // pred_check
      _
    $region83: #{tpu_custom_call.1} parent=1 // pred_check_branch
      %1634 = sbr.rel (0) target = $region85
    $region84: #{tpu_custom_call.1} parent=1 // pred_region
      %s1636 = ssub.s32 128, 128
      %1637 = vsyncadd [#allocation4], %s1636
      %s1639 = sshll.u32 [#allocation14], 4
      %s1640 = int_to_ptr.vmem [resolvable:$true] %s1639
      %1642 = dma.vmem_to_hbm [thread:$0]  %s1640, 128, %s13, [#allocation4]
    $region85: #{tpu_custom_call.1} parent=1 // pred_fallthru
      _
    // Predicated region
    $region86: #{tpu_custom_call.1} parent=1 // pred_check
      _
    $region87: #{tpu_custom_call.1} parent=1 // pred_check_branch
      %1644 = sbr.rel (0) target = $region89
    $region88: #{tpu_custom_call.1} parent=1 // pred_region
      %1645 = dma.done [#allocation4], 128
    $region89: #{tpu_custom_call.1} parent=1 // pred_fallthru
      _
    %1646 = vsyncpa [#allocation3], 1
    %1647 = vsyncpa [#allocation6], 1
    %1648 = vsyncpa [#allocation9], 1
    %1649 = vsyncpa [#allocation12], 1
    %1650 = vsyncpa [#allocation4], 1

</llo_original>
